<compile_context>
chip_gen: v7x
topology: tpu7x:2x2x1
jax: 0.10.0
libtpu: 0.0.40
codegen_flags: <defaults>
</compile_context>

<pallas_src>
import functools
import math

import jax
import jax.numpy as jnp
from jax.experimental import pallas as pl
from jax.experimental.pallas import tpu as pltpu


def _cdiv(a, b):
    return -(-a // b)


def _rpn_head_kernel(xa_ref, xb_ref, w3f_ref, b3_ref, wft_ref, bf_ref,
                     cls_ref, box_ref, *, th, W, C, A, compute_dtype):
    """One (batch, row-tile) grid step.

    xa_ref : (1, th, W+2, C)   padded NHWC rows [i*th, i*th+th)       (main tile)
    xb_ref : (1, 2,  W+2, C)   padded NHWC rows [i*th+th, i*th+th+2)  (bottom halo)
    w3f_ref: (3, 3C, C)        3x3 weight, dy folded into K: [dx, dy*C+ci, co]
    b3_ref : (1, C)
    wft_ref: (5A, C)           fused 1x1 weight, rows = [cls (A) ; bbox (4A)]
    bf_ref : (5A, 1)
    cls_ref: (1, A,  th*W)     channel-major, flat-spatial (lane-dense) outputs
    box_ref: (1, 4A, th*W)
    """
    xa = xa_ref[0]                                    # (th,   W+2, C)
    xb = xb_ref[0]                                    # (2,    W+2, C)
    xp = jnp.concatenate([xa, xb], axis=0)            # (th+2, W+2, C)

    # 3x3 "same" conv as 3 MXU matmuls: for each dx, the three dy taps are
    # concatenated along channels so the contraction dim is 3C.
    acc = jnp.zeros((th * W, C), jnp.float32)
    for dx in range(3):
        xs = xp[:, dx:dx + W, :]                      # (th+2, W, C)
        x3 = jnp.concatenate(
            [xs[0:th], xs[1:th + 1], xs[2:th + 2]], axis=-1)   # (th, W, 3C)
        x3 = x3.reshape(th * W, 3 * C).astype(compute_dtype)
        acc = acc + jnp.dot(x3, w3f_ref[dx],
                            preferred_element_type=jnp.float32)

    t = jnp.maximum(acc + b3_ref[...], 0.0).astype(compute_dtype)  # (th*W, C)

    # Fused cls+bbox 1x1 conv, produced channel-major:
    #   y[j, m] = sum_c wft[j, c] * t[m, c]
    y = jax.lax.dot_general(wft_ref[...], t,
                            dimension_numbers=(((1,), (1,)), ((), ())),
                            preferred_element_type=jnp.float32)     # (5A, th*W)
    y = y + bf_ref[...]

    cls_ref[0] = y[:A].astype(cls_ref.dtype)
    box_ref[0] = y[A:].astype(box_ref.dtype)


def _rpn_head_single_level(x_nchw, kparams, *, compute_dtype,
                           max_rows_per_tile=64):
    """Run the fused RPN head on one NCHW feature map."""
    w3f, b3, wft, bf = kparams
    N, C, H, W = x_nchw.shape
    A = wft.shape[0] // 5

    # Row-tile size: multiple of 8, and th*W a multiple of 128 when tiled so
    # the flat-spatial output blocks satisfy the (8,128) constraint.
    n_tiles = _cdiv(H, max_rows_per_tile)
    rows = _cdiv(H, n_tiles)
    if n_tiles > 1:
        q = 128 // math.gcd(W, 128)
        quantum = 8 * q // math.gcd(8, q)   # lcm(8, q)
    else:
        quantum = 8
    th = _cdiv(rows, quantum) * quantum
    n_tiles = _cdiv(H, th)
    Hp = n_tiles * th

    # NCHW -> NHWC, cast to compute dtype (halves kernel HBM reads for f32
    # inputs), and spatial zero pad (1 top, Hp-H+1 bottom, 1 left/right).
    # TODO(synk): fold this transpose+pad into an in-kernel halo DMA.
    x_nhwc = jnp.transpose(x_nchw, (0, 2, 3, 1)).astype(compute_dtype)
    xpad = jnp.pad(x_nhwc, ((0, 0), (1, Hp - H + 1), (1, 1), (0, 0)))

    out_dtype = x_nchw.dtype
    kernel = functools.partial(_rpn_head_kernel, th=th, W=W, C=C, A=A,
                               compute_dtype=compute_dtype)

    def full(a):
        return pl.BlockSpec(a.shape, lambda n, i: (0,) * a.ndim)

    compiler_kwargs = dict(dimension_semantics=("parallel", "parallel"))
    tile_bytes = ((th + 2) * (W + 2) * max(C, 8)
                  * jnp.dtype(compute_dtype).itemsize)
    if 10 * tile_bytes > (12 << 20):   # only raise the scoped limit for big tiles
        compiler_kwargs["vmem_limit_bytes"] = int(min(20 * tile_bytes, 100 << 20))

    cls_flat, box_flat = pl.pallas_call(
        kernel,
        out_shape=(
            jax.ShapeDtypeStruct((N, A, Hp * W), out_dtype),
            jax.ShapeDtypeStruct((N, 4 * A, Hp * W), out_dtype),
        ),
        grid_spec=pltpu.PrefetchScalarGridSpec(
            num_scalar_prefetch=0,
            grid=(N, n_tiles),
            in_specs=[
                # main row tile
                pl.BlockSpec((1, th, W + 2, C), lambda n, i: (n, i, 0, 0)),
                # 2-row bottom halo of the same padded array (block size 2):
                # element offset = block_index * 2 = (i+1)*th  (th is even).
                pl.BlockSpec((1, 2, W + 2, C),
                             lambda n, i: (n, (i + 1) * (th // 2), 0, 0)),
                full(w3f), full(b3), full(wft), full(bf),
            ],
            out_specs=[
                pl.BlockSpec((1, A, th * W), lambda n, i: (n, 0, i)),
                pl.BlockSpec((1, 4 * A, th * W), lambda n, i: (n, 0, i)),
            ],
        ),
        compiler_params=pltpu.CompilerParams(**compiler_kwargs),
    )(xpad, xpad, w3f, b3, wft, bf)

    cls = cls_flat.reshape(N, A, Hp, W)        # free reshape (contiguous)
    box = box_flat.reshape(N, 4 * A, Hp, W)
    if Hp != H:
        cls = cls[:, :, :H, :]
        box = box[:, :, :H, :]
    return cls, box


def init_rpn_head_params(key, in_channels, num_anchors):
    """PyTorch-layout params: normal(std=0.01) weights, zero biases."""
    k1, k2, k3 = jax.random.split(key, 3)
    C, A = in_channels, num_anchors
    return dict(
        conv_w=0.01 * jax.random.normal(k1, (C, C, 3, 3), jnp.float32),   # OIHW
        conv_b=jnp.zeros((C,), jnp.float32),
        cls_w=0.01 * jax.random.normal(k2, (A, C, 1, 1), jnp.float32),
        cls_b=jnp.zeros((A,), jnp.float32),
        bbox_w=0.01 * jax.random.normal(k3, (4 * A, C, 1, 1), jnp.float32),
        bbox_b=jnp.zeros((4 * A,), jnp.float32),
    )


def prepare_kernel_params(params, compute_dtype=jnp.bfloat16):
    """Reshape PyTorch-layout weights into the kernel-friendly fused forms."""
    C = params["conv_w"].shape[0]
    A = params["cls_w"].shape[0]
    w_hwio = jnp.transpose(params["conv_w"], (2, 3, 1, 0))       # (3,3,Cin,Cout)
    # w3f[dx, dy*C + ci, co] = conv_w[co, ci, dy, dx]
    w3f = jnp.stack([w_hwio[:, dx].reshape(3 * C, C) for dx in range(3)], axis=0)
    b3 = params["conv_b"].reshape(1, C)
    wft = jnp.concatenate([params["cls_w"].reshape(A, C),
                           params["bbox_w"].reshape(4 * A, C)], axis=0)  # (5A, C)
    bf = jnp.concatenate([params["cls_b"], params["bbox_b"]]).reshape(5 * A, 1)
    return (w3f.astype(compute_dtype), b3.astype(jnp.float32),
            wft.astype(compute_dtype), bf.astype(jnp.float32))


def rpn_head_forward(x_list, params, *, compute_dtype=jnp.bfloat16,
                     max_rows_per_tile=64):
    """Matches RPNHead.forward: list of NCHW feature maps ->
    (logits list, bbox_reg list), both NCHW."""
    kparams = prepare_kernel_params(params, compute_dtype=compute_dtype)
    logits, bbox_reg = [], []
    for feature in x_list:
        cls, box = _rpn_head_single_level(feature, kparams,
                                          compute_dtype=compute_dtype,
                                          max_rows_per_tile=max_rows_per_tile)
        logits.append(cls)
        bbox_reg.append(box)
    return logits, bbox_reg


def _reference_forward(x_list, params):
    """Pure-JAX (lax conv, f32) reference for correctness checking."""
    dn = jax.lax.conv_dimension_numbers(x_list[0].shape, params["conv_w"].shape,
                                        ("NCHW", "OIHW", "NCHW"))
    logits, bbox_reg = [], []
    for x in x_list:
        t = jax.lax.conv_general_dilated(x, params["conv_w"], (1, 1),
                                         ((1, 1), (1, 1)), dimension_numbers=dn)
        t = jax.nn.relu(t + params["conv_b"].reshape(1, -1, 1, 1))
        c = jax.lax.conv_general_dilated(t, params["cls_w"], (1, 1), "VALID",
                                         dimension_numbers=dn)
        c = c + params["cls_b"].reshape(1, -1, 1, 1)
        b = jax.lax.conv_general_dilated(t, params["bbox_w"], (1, 1), "VALID",
                                         dimension_numbers=dn)
        b = b + params["bbox_b"].reshape(1, -1, 1, 1)
        logits.append(c)
        bbox_reg.append(b)
    return logits, bbox_reg


if __name__ == "__main__":
    key = jax.random.PRNGKey(0)
    k_params, k_x1, k_x2 = jax.random.split(key, 3)

    in_channels, num_anchors = 4, 3
    params = init_rpn_head_params(k_params, in_channels, num_anchors)

    # Two feature levels, NCHW (same convention as the PyTorch module).
    x_list = [
        jax.random.normal(k_x1, (2, in_channels, 16, 16), jnp.float32),
        jax.random.normal(k_x2, (2, in_channels, 8, 8), jnp.float32),
    ]

    # max_rows_per_tile=8 so the 16x16 level exercises the (batch, row-tile)
    # grid + halo path (2 tiles); the 8x8 level runs as a single tile.
    logits, bbox_reg = rpn_head_forward(x_list, params, max_rows_per_tile=8)
    jax.block_until_ready(logits)
    jax.block_until_ready(bbox_reg)

    ref_logits, ref_bbox = _reference_forward(x_list, params)
    # bf16 MXU operands with f32 accumulation -> bf16-level tolerance.
    for a, b in zip(logits, ref_logits):
        assert a.shape == b.shape, (a.shape, b.shape)
        assert jnp.allclose(a, b, atol=5e-4, rtol=5e-2), \
            float(jnp.max(jnp.abs(a - b)))
    for a, b in zip(bbox_reg, ref_bbox):
        assert a.shape == b.shape, (a.shape, b.shape)
        assert jnp.allclose(a, b, atol=5e-4, rtol=5e-2), \
            float(jnp.max(jnp.abs(a - b)))

    print("KERNEL_OK")
</pallas_src>

<mosaic_0001>
module attributes {stable_mosaic.version = 11 : i64} {
  func.func @_rpn_head_kernel(%arg0: i32, %arg1: i32, %arg2: memref<1x8x18x4xbf16, #tpu.memory_space<vmem>>, %arg3: memref<1x2x18x4xbf16, #tpu.memory_space<vmem>>, %arg4: memref<3x12x4xbf16, #tpu.memory_space<vmem>>, %arg5: memref<1x4xf32, #tpu.memory_space<vmem>>, %arg6: memref<15x4xbf16, #tpu.memory_space<vmem>>, %arg7: memref<15x1xf32, #tpu.memory_space<vmem>>, %arg8: memref<1x3x128xf32, #tpu.memory_space<vmem>>, %arg9: memref<1x12x128xf32, #tpu.memory_space<vmem>>) attributes {dimension_semantics = [#tpu.dimension_semantics<parallel>, #tpu.dimension_semantics<parallel>], iteration_bounds = array<i64: 2, 2>, scalar_prefetch = 0 : i64, scratch_operands = 0 : i64, tpu.core_type = #tpu.core_type<tc>, window_params = [{transform_indices = @transform_0, window_bounds = array<i64: 1, 8, 18, 4>}, {transform_indices = @transform_1, window_bounds = array<i64: 1, 2, 18, 4>}, {pipeline_mode = #tpu.pipeline_mode<synchronous>, transform_indices = @transform_2, window_bounds = array<i64: 3, 12, 4>}, {pipeline_mode = #tpu.pipeline_mode<synchronous>, transform_indices = @transform_3, window_bounds = array<i64: 1, 4>}, {pipeline_mode = #tpu.pipeline_mode<synchronous>, transform_indices = @transform_4, window_bounds = array<i64: 15, 4>}, {pipeline_mode = #tpu.pipeline_mode<synchronous>, transform_indices = @transform_5, window_bounds = array<i64: 15, 1>}, {transform_indices = @transform_6, window_bounds = array<i64: 1, 3, 128>}, {transform_indices = @transform_7, window_bounds = array<i64: 1, 12, 128>}]} {
    %c0 = arith.constant 0 : index
    %c0_0 = arith.constant 0 : index
    %c0_1 = arith.constant 0 : index
    %c0_2 = arith.constant 0 : index
    %0 = vector.load %arg2[%c0, %c0_0, %c0_1, %c0_2] : memref<1x8x18x4xbf16, #tpu.memory_space<vmem>>, vector<1x8x18x4xbf16>
    %1 = vector.shape_cast %0 : vector<1x8x18x4xbf16> to vector<8x18x4xbf16>
    %c0_3 = arith.constant 0 : index
    %c0_4 = arith.constant 0 : index
    %c0_5 = arith.constant 0 : index
    %c0_6 = arith.constant 0 : index
    %2 = vector.load %arg3[%c0_3, %c0_4, %c0_5, %c0_6] : memref<1x2x18x4xbf16, #tpu.memory_space<vmem>>, vector<1x2x18x4xbf16>
    %3 = vector.shape_cast %2 : vector<1x2x18x4xbf16> to vector<2x18x4xbf16>
    %4 = tpu.concatenate %1, %3 in 0 : vector<8x18x4xbf16>, vector<2x18x4xbf16> -> vector<10x18x4xbf16>
    %cst = arith.constant 0.000000e+00 : f32
    %5 = vector.broadcast %cst : f32 to vector<128x4xf32>
    %6 = vector.extract_strided_slice %4 {offsets = [0, 0, 0], sizes = [10, 16, 4], strides = [1, 1, 1]} : vector<10x18x4xbf16> to vector<10x16x4xbf16>
    %7 = vector.extract_strided_slice %6 {offsets = [0, 0, 0], sizes = [8, 16, 4], strides = [1, 1, 1]} : vector<10x16x4xbf16> to vector<8x16x4xbf16>
    %8 = vector.extract_strided_slice %6 {offsets = [1, 0, 0], sizes = [8, 16, 4], strides = [1, 1, 1]} : vector<10x16x4xbf16> to vector<8x16x4xbf16>
    %9 = vector.extract_strided_slice %6 {offsets = [2, 0, 0], sizes = [8, 16, 4], strides = [1, 1, 1]} : vector<10x16x4xbf16> to vector<8x16x4xbf16>
    %10 = tpu.concatenate %7, %8, %9 in 2 : vector<8x16x4xbf16>, vector<8x16x4xbf16>, vector<8x16x4xbf16> -> vector<8x16x12xbf16>
    %11 = vector.shape_cast %10 : vector<8x16x12xbf16> to vector<128x12xbf16>
    %c0_7 = arith.constant 0 : index
    %c0_8 = arith.constant 0 : index
    %c0_9 = arith.constant 0 : index
    %12 = vector.load %arg4[%c0_7, %c0_8, %c0_9] : memref<3x12x4xbf16, #tpu.memory_space<vmem>>, vector<1x12x4xbf16>
    %13 = vector.shape_cast %12 : vector<1x12x4xbf16> to vector<12x4xbf16>
    %cst_10 = arith.constant dense<0.000000e+00> : vector<128x4xf32>
    %14 = tpu.matmul %11, %13, %cst_10 {dimension_numbers = #tpu.dot_dimension_numbers<[1], [0], [0], [1], [0, 0, 1, 1], [], []>} : vector<128x12xbf16>, vector<12x4xbf16>, vector<128x4xf32> -> vector<128x4xf32>
    %15 = arith.addf %5, %14 : vector<128x4xf32>
    %16 = vector.extract_strided_slice %4 {offsets = [0, 1, 0], sizes = [10, 16, 4], strides = [1, 1, 1]} : vector<10x18x4xbf16> to vector<10x16x4xbf16>
    %17 = vector.extract_strided_slice %16 {offsets = [0, 0, 0], sizes = [8, 16, 4], strides = [1, 1, 1]} : vector<10x16x4xbf16> to vector<8x16x4xbf16>
    %18 = vector.extract_strided_slice %16 {offsets = [1, 0, 0], sizes = [8, 16, 4], strides = [1, 1, 1]} : vector<10x16x4xbf16> to vector<8x16x4xbf16>
    %19 = vector.extract_strided_slice %16 {offsets = [2, 0, 0], sizes = [8, 16, 4], strides = [1, 1, 1]} : vector<10x16x4xbf16> to vector<8x16x4xbf16>
    %20 = tpu.concatenate %17, %18, %19 in 2 : vector<8x16x4xbf16>, vector<8x16x4xbf16>, vector<8x16x4xbf16> -> vector<8x16x12xbf16>
    %21 = vector.shape_cast %20 : vector<8x16x12xbf16> to vector<128x12xbf16>
    %c1 = arith.constant 1 : index
    %c0_11 = arith.constant 0 : index
    %c0_12 = arith.constant 0 : index
    %22 = vector.load %arg4[%c1, %c0_11, %c0_12] : memref<3x12x4xbf16, #tpu.memory_space<vmem>>, vector<1x12x4xbf16>
    %23 = vector.shape_cast %22 : vector<1x12x4xbf16> to vector<12x4xbf16>
    %cst_13 = arith.constant dense<0.000000e+00> : vector<128x4xf32>
    %24 = tpu.matmul %21, %23, %cst_13 {dimension_numbers = #tpu.dot_dimension_numbers<[1], [0], [0], [1], [0, 0, 1, 1], [], []>} : vector<128x12xbf16>, vector<12x4xbf16>, vector<128x4xf32> -> vector<128x4xf32>
    %25 = arith.addf %15, %24 : vector<128x4xf32>
    %26 = vector.extract_strided_slice %4 {offsets = [0, 2, 0], sizes = [10, 16, 4], strides = [1, 1, 1]} : vector<10x18x4xbf16> to vector<10x16x4xbf16>
    %27 = vector.extract_strided_slice %26 {offsets = [0, 0, 0], sizes = [8, 16, 4], strides = [1, 1, 1]} : vector<10x16x4xbf16> to vector<8x16x4xbf16>
    %28 = vector.extract_strided_slice %26 {offsets = [1, 0, 0], sizes = [8, 16, 4], strides = [1, 1, 1]} : vector<10x16x4xbf16> to vector<8x16x4xbf16>
    %29 = vector.extract_strided_slice %26 {offsets = [2, 0, 0], sizes = [8, 16, 4], strides = [1, 1, 1]} : vector<10x16x4xbf16> to vector<8x16x4xbf16>
    %30 = tpu.concatenate %27, %28, %29 in 2 : vector<8x16x4xbf16>, vector<8x16x4xbf16>, vector<8x16x4xbf16> -> vector<8x16x12xbf16>
    %31 = vector.shape_cast %30 : vector<8x16x12xbf16> to vector<128x12xbf16>
    %c2 = arith.constant 2 : index
    %c0_14 = arith.constant 0 : index
    %c0_15 = arith.constant 0 : index
    %32 = vector.load %arg4[%c2, %c0_14, %c0_15] : memref<3x12x4xbf16, #tpu.memory_space<vmem>>, vector<1x12x4xbf16>
    %33 = vector.shape_cast %32 : vector<1x12x4xbf16> to vector<12x4xbf16>
    %cst_16 = arith.constant dense<0.000000e+00> : vector<128x4xf32>
    %34 = tpu.matmul %31, %33, %cst_16 {dimension_numbers = #tpu.dot_dimension_numbers<[1], [0], [0], [1], [0, 0, 1, 1], [], []>} : vector<128x12xbf16>, vector<12x4xbf16>, vector<128x4xf32> -> vector<128x4xf32>
    %35 = arith.addf %25, %34 : vector<128x4xf32>
    %c0_17 = arith.constant 0 : index
    %c0_18 = arith.constant 0 : index
    %36 = vector.load %arg5[%c0_17, %c0_18] : memref<1x4xf32, #tpu.memory_space<vmem>>, vector<1x4xf32>
    %37 = vector.broadcast %36 : vector<1x4xf32> to vector<128x4xf32>
    %38 = arith.addf %35, %37 : vector<128x4xf32>
    %cst_19 = arith.constant 0.000000e+00 : f32
    %39 = vector.broadcast %cst_19 : f32 to vector<128x4xf32>
    %40 = arith.maximumf %38, %39 : vector<128x4xf32>
    %41 = arith.truncf %40 : vector<128x4xf32> to vector<128x4xbf16>
    %c0_20 = arith.constant 0 : index
    %c0_21 = arith.constant 0 : index
    %42 = vector.load %arg6[%c0_20, %c0_21] : memref<15x4xbf16, #tpu.memory_space<vmem>>, vector<15x4xbf16>
    %cst_22 = arith.constant dense<0.000000e+00> : vector<15x128xf32>
    %43 = tpu.matmul %42, %41, %cst_22 {dimension_numbers = #tpu.dot_dimension_numbers<[1], [1], [0], [0], [0, 0, 1, 0], [], []>} : vector<15x4xbf16>, vector<128x4xbf16>, vector<15x128xf32> -> vector<15x128xf32>
    %c0_23 = arith.constant 0 : index
    %c0_24 = arith.constant 0 : index
    %44 = vector.load %arg7[%c0_23, %c0_24] : memref<15x1xf32, #tpu.memory_space<vmem>>, vector<15x1xf32>
    %45 = vector.broadcast %44 : vector<15x1xf32> to vector<15x128xf32>
    %46 = arith.addf %43, %45 : vector<15x128xf32>
    %47 = vector.extract_strided_slice %46 {offsets = [0, 0], sizes = [3, 128], strides = [1, 1]} : vector<15x128xf32> to vector<3x128xf32>
    %c0_25 = arith.constant 0 : index
    %c0_26 = arith.constant 0 : index
    %c0_27 = arith.constant 0 : index
    %48 = vector.load %arg8[%c0_25, %c0_26, %c0_27] : memref<1x3x128xf32, #tpu.memory_space<vmem>>, vector<1x3x128xf32>
    %49 = vector.shape_cast %48 : vector<1x3x128xf32> to vector<3x128xf32>
    %50 = vector.shape_cast %47 : vector<3x128xf32> to vector<1x3x128xf32>
    tpu.vector_store %arg8[%c0_25, %c0_26, %c0_27], %50 {strides = array<i32>} : memref<1x3x128xf32, #tpu.memory_space<vmem>>, vector<1x3x128xf32>,
    %51 = vector.extract_strided_slice %46 {offsets = [3, 0], sizes = [12, 128], strides = [1, 1]} : vector<15x128xf32> to vector<12x128xf32>
    %c0_28 = arith.constant 0 : index
    %c0_29 = arith.constant 0 : index
    %c0_30 = arith.constant 0 : index
    %52 = vector.load %arg9[%c0_28, %c0_29, %c0_30] : memref<1x12x128xf32, #tpu.memory_space<vmem>>, vector<1x12x128xf32>
    %53 = vector.shape_cast %52 : vector<1x12x128xf32> to vector<12x128xf32>
    %54 = vector.shape_cast %51 : vector<12x128xf32> to vector<1x12x128xf32>
    tpu.vector_store %arg9[%c0_28, %c0_29, %c0_30], %54 {strides = array<i32>} : memref<1x12x128xf32, #tpu.memory_space<vmem>>, vector<1x12x128xf32>,
    return
  }
  func.func @transform_0(%arg0: i32, %arg1: i32) -> (i32, i32, i32, i32) {
    %c0_i32 = arith.constant 0 : i32
    %c0_i32_0 = arith.constant 0 : i32
    %c0_i32_1 = arith.constant 0 : i32
    return %arg0, %arg1, %c0_i32, %c0_i32_0 : i32, i32, i32, i32
  }
  func.func @transform_1(%arg0: i32, %arg1: i32) -> (i32, i32, i32, i32) {
    %c1_i32 = arith.constant 1 : i32
    %0 = arith.addi %arg1, %c1_i32 : i32
    %c4_i32 = arith.constant 4 : i32
    %1 = arith.muli %0, %c4_i32 : i32
    %c0_i32 = arith.constant 0 : i32
    %c0_i32_0 = arith.constant 0 : i32
    %c0_i32_1 = arith.constant 0 : i32
    return %arg0, %1, %c0_i32, %c0_i32_0 : i32, i32, i32, i32
  }
  func.func @transform_2(%arg0: i32, %arg1: i32) -> (i32, i32, i32) {
    %c0_i32 = arith.constant 0 : i32
    %c0_i32_0 = arith.constant 0 : i32
    %c0_i32_1 = arith.constant 0 : i32
    %c0_i32_2 = arith.constant 0 : i32
    return %c0_i32, %c0_i32_0, %c0_i32_1 : i32, i32, i32
  }
  func.func @transform_3(%arg0: i32, %arg1: i32) -> (i32, i32) {
    %c0_i32 = arith.constant 0 : i32
    %c0_i32_0 = arith.constant 0 : i32
    %c0_i32_1 = arith.constant 0 : i32
    return %c0_i32, %c0_i32_0 : i32, i32
  }
  func.func @transform_4(%arg0: i32, %arg1: i32) -> (i32, i32) {
    %c0_i32 = arith.constant 0 : i32
    %c0_i32_0 = arith.constant 0 : i32
    %c0_i32_1 = arith.constant 0 : i32
    return %c0_i32, %c0_i32_0 : i32, i32
  }
  func.func @transform_5(%arg0: i32, %arg1: i32) -> (i32, i32) {
    %c0_i32 = arith.constant 0 : i32
    %c0_i32_0 = arith.constant 0 : i32
    %c0_i32_1 = arith.constant 0 : i32
    return %c0_i32, %c0_i32_0 : i32, i32
  }
  func.func @transform_6(%arg0: i32, %arg1: i32) -> (i32, i32, i32) {
    %c0_i32 = arith.constant 0 : i32
    %c0_i32_0 = arith.constant 0 : i32
    return %arg0, %c0_i32, %arg1 : i32, i32, i32
  }
  func.func @transform_7(%arg0: i32, %arg1: i32) -> (i32, i32, i32) {
    %c0_i32 = arith.constant 0 : i32
    %c0_i32_0 = arith.constant 0 : i32
    return %arg0, %c0_i32, %arg1 : i32, i32, i32
  }
}

</mosaic_0001>

<llo_original>
// kernel: tpu_custom_call.1
$region0: #{tpu_custom_call.1}
  #allocation0 [shape = 'u32[]', space=smem, size = 0x4, offset = 0x4, fixed_abs, tag = 'smem constant byte address 0x4 - core index']
  #allocation1 [shape = 'u32[144,128]{1,0:T(1,128)}', space=vmem, size = 0x12000, scoped, tag = 'internal scratch']
  %s0 = inlined_call_operand.vmem [shape: bf16[2,18,18,4], index: 0, kind: input, shape index: {}]
  %s1 = inlined_call_operand.vmem [shape: bf16[2,18,18,4], index: 1, kind: input, shape index: {}]
  %s2 = inlined_call_operand.vmem [shape: bf16[3,12,4], index: 2, kind: input, shape index: {}]
  %s3 = inlined_call_operand.vmem [shape: f32[1,4], index: 3, kind: input, shape index: {}]
  %s4 = inlined_call_operand.vmem [shape: bf16[15,4], index: 4, kind: input, shape index: {}]
  %s5 = inlined_call_operand.vmem [shape: f32[15,1], index: 5, kind: input, shape index: {}]
  %s6 = inlined_call_operand.vmem [shape: f32[2,3,256], index: 6, kind: output, shape index: {0}]
  %s7 = inlined_call_operand.vmem [shape: f32[2,12,256], index: 7, kind: output, shape index: {1}]
  %8 = xla_tuple %s6, %s7
  %s9 = sld [smem:[#allocation0]]
  $region99: #{tpu_custom_call.1} parent=0
    _
  %s11 = ssub.s32 1, %s9
  %s12 = scalar_select 0, %s11, %s9
  $region1: #{tpu_custom_call.1} parent=0
    #allocation2 [shape = 'u8[16384]{0}', space=vmem, size = 0x4000, scoped, tag = 'output window, operand 1']
    loop: start=0, step=1, limit=6
    $region2: #{tpu_custom_call.1} parent=1 // loop_pre_header
      _
    $region3: #{tpu_custom_call.1} parent=1 // loop_header
      %s14 = sphi 0, %s18
      %p15 = scmp.ge.s32.totalorder %s14, 6
      %s21 = sphi 0, %s33
      %s22 = sphi 0, %s29
      %s23 = sphi 0, %s21
      %s24 = sphi 0, %s22
      %s25 = sphi 0, %s23
      %s26 = sphi 0, %s24
      %s38 = sphi 0, %s40
      %s41 = sphi 0, %s38
      %s42 = sphi 0, %s41
      %s58 = sphi 0, %s42
      %s70 = sphi 0, %s72
      %s73 = sphi 0, %s70
      %s74 = sphi 0, %s73
      %s90 = sphi 0, %s74
      %s94 = sphi 0, %s94
      %s96 = sphi 0, %s94
      %s97 = sphi 0, %s96
      %s111 = sphi 0, %s97
      %s115 = sphi 0, %s115
      %s117 = sphi 0, %s115
      %s118 = sphi 0, %s117
      %s132 = sphi 0, %s118
      %s136 = sphi 0, %s136
      %s138 = sphi 0, %s136
      %s139 = sphi 0, %s138
      %s153 = sphi 0, %s139
      %s157 = sphi 0, %s157
      %s159 = sphi 0, %s157
      %s160 = sphi 0, %s159
      %s174 = sphi 0, %s160
      %s182 = sphi 0, %s184
      %s185 = sphi 0, %s182
      %s186 = sphi 0, %s185
      %s202 = sphi 0, %s186
      %s210 = sphi 0, %s212
      %s213 = sphi 0, %s210
      %s214 = sphi 0, %s213
      %s230 = sphi 0, %s214
    $region4: #{tpu_custom_call.1} parent=1 // loop_header_branch
      %17 = sbr.rel (%p15) target = $region8
    $region5: #{tpu_custom_call.1} parent=1 // loop_body
      %s19 = ssub.s32 %s14, 1
      %s20 = ssub.s32 %s14, 2
      %s27 = sadd.s32 1, %s22
      %p28 = scmp.ge.s32.totalorder %s27, 2
      %s29 = scalar_select %p28, 0, %s27
      %s30 = sadd.s32 1, %s21
      %s31 = scalar_select %p28, %s30, %s21
      %p32 = scmp.ge.s32.totalorder %s31, 2
      %s33 = scalar_select %p32, 0, %s31
      %s34 = ssub.s32 %s21, %s33
      %s35 = ssub.s32 %s22, %s29
      %s36 = sor.u32 %s34, %s35
      %p37 = scmp.eq.s32.totalorder %s36, 0
      %s39 = sadd.s32 %s38, 1
      %s40 = scalar_select %p37, %s38, %s39
      %p43 = pneg %p37
      %p44 = scmp.eq.s32.totalorder %s14, 3
      %p45 = por %p43, %p44
      %p46 = scmp.ne.s32.totalorder %s38, %s41
      %p47 = scmp.eq.s32.totalorder %s14, 0
      %p48 = por %p46, %p47
      %p49 = scmp.ne.s32.totalorder %s38, %s41
      %p50 = scmp.eq.s32.totalorder %s19, 3
      %p51 = por %p49, %p50
      %p52 = scmp.ne.s32.totalorder %s41, %s42
      %p53 = scmp.eq.s32.totalorder %s19, 0
      %p54 = por %p52, %p53
      %p55 = scmp.ne.s32.totalorder %s41, %s42
      %p56 = scmp.eq.s32.totalorder %s20, 3
      %p57 = por %p55, %p56
      %p59 = scmp.ne.s32.totalorder %s42, %s58
      %p60 = scmp.eq.s32.totalorder %s20, 0
      %p61 = por %p59, %p60
      %s62 = sadd.s32 %s22, 1
      %s63 = smul.u32 %s62, 4
      %s64 = sadd.s32 %s29, 1
      %s65 = smul.u32 %s64, 4
      %s66 = ssub.s32 %s21, %s33
      %s67 = ssub.s32 %s63, %s65
      %s68 = sor.u32 %s66, %s67
      %p69 = scmp.eq.s32.totalorder %s68, 0
      %s71 = sadd.s32 %s70, 1
      %s72 = scalar_select %p69, %s70, %s71
      %p75 = pneg %p69
      %p76 = scmp.eq.s32.totalorder %s14, 3
      %p77 = por %p75, %p76
      %p78 = scmp.ne.s32.totalorder %s70, %s73
      %p79 = scmp.eq.s32.totalorder %s14, 0
      %p80 = por %p78, %p79
      %p81 = scmp.ne.s32.totalorder %s70, %s73
      %p82 = scmp.eq.s32.totalorder %s19, 3
      %p83 = por %p81, %p82
      %p84 = scmp.ne.s32.totalorder %s73, %s74
      %p85 = scmp.eq.s32.totalorder %s19, 0
      %p86 = por %p84, %p85
      %p87 = scmp.ne.s32.totalorder %s73, %s74
      %p88 = scmp.eq.s32.totalorder %s20, 3
      %p89 = por %p87, %p88
      %p91 = scmp.ne.s32.totalorder %s74, %s90
      %p92 = scmp.eq.s32.totalorder %s20, 0
      %p93 = por %p91, %p92
      %s95 = sadd.s32 %s94, 1
      %p98 = scmp.eq.s32.totalorder %s14, 3
      %p99 = scmp.ne.s32.totalorder %s94, %s96
      %p100 = scmp.eq.s32.totalorder %s14, 0
      %p101 = por %p99, %p100
      %p102 = scmp.ne.s32.totalorder %s94, %s96
      %p103 = scmp.eq.s32.totalorder %s19, 3
      %p104 = por %p102, %p103
      %p105 = scmp.ne.s32.totalorder %s96, %s97
      %p106 = scmp.eq.s32.totalorder %s19, 0
      %p107 = por %p105, %p106
      %p108 = scmp.ne.s32.totalorder %s96, %s97
      %p109 = scmp.eq.s32.totalorder %s20, 3
      %p110 = por %p108, %p109
      %p112 = scmp.ne.s32.totalorder %s97, %s111
      %p113 = scmp.eq.s32.totalorder %s20, 0
      %p114 = por %p112, %p113
      %s116 = sadd.s32 %s115, 1
      %p119 = scmp.eq.s32.totalorder %s14, 3
      %p120 = scmp.ne.s32.totalorder %s115, %s117
      %p121 = scmp.eq.s32.totalorder %s14, 0
      %p122 = por %p120, %p121
      %p123 = scmp.ne.s32.totalorder %s115, %s117
      %p124 = scmp.eq.s32.totalorder %s19, 3
      %p125 = por %p123, %p124
      %p126 = scmp.ne.s32.totalorder %s117, %s118
      %p127 = scmp.eq.s32.totalorder %s19, 0
      %p128 = por %p126, %p127
      %p129 = scmp.ne.s32.totalorder %s117, %s118
      %p130 = scmp.eq.s32.totalorder %s20, 3
      %p131 = por %p129, %p130
      %p133 = scmp.ne.s32.totalorder %s118, %s132
      %p134 = scmp.eq.s32.totalorder %s20, 0
      %p135 = por %p133, %p134
      %s137 = sadd.s32 %s136, 1
      %p140 = scmp.eq.s32.totalorder %s14, 3
      %p141 = scmp.ne.s32.totalorder %s136, %s138
      %p142 = scmp.eq.s32.totalorder %s14, 0
      %p143 = por %p141, %p142
      %p144 = scmp.ne.s32.totalorder %s136, %s138
      %p145 = scmp.eq.s32.totalorder %s19, 3
      %p146 = por %p144, %p145
      %p147 = scmp.ne.s32.totalorder %s138, %s139
      %p148 = scmp.eq.s32.totalorder %s19, 0
      %p149 = por %p147, %p148
      %p150 = scmp.ne.s32.totalorder %s138, %s139
      %p151 = scmp.eq.s32.totalorder %s20, 3
      %p152 = por %p150, %p151
      %p154 = scmp.ne.s32.totalorder %s139, %s153
      %p155 = scmp.eq.s32.totalorder %s20, 0
      %p156 = por %p154, %p155
      %s158 = sadd.s32 %s157, 1
      %p161 = scmp.eq.s32.totalorder %s14, 3
      %p162 = scmp.ne.s32.totalorder %s157, %s159
      %p163 = scmp.eq.s32.totalorder %s14, 0
      %p164 = por %p162, %p163
      %p165 = scmp.ne.s32.totalorder %s157, %s159
      %p166 = scmp.eq.s32.totalorder %s19, 3
      %p167 = por %p165, %p166
      %p168 = scmp.ne.s32.totalorder %s159, %s160
      %p169 = scmp.eq.s32.totalorder %s19, 0
      %p170 = por %p168, %p169
      %p171 = scmp.ne.s32.totalorder %s159, %s160
      %p172 = scmp.eq.s32.totalorder %s20, 3
      %p173 = por %p171, %p172
      %p175 = scmp.ne.s32.totalorder %s160, %s174
      %p176 = scmp.eq.s32.totalorder %s20, 0
      %p177 = por %p175, %p176
      %s178 = ssub.s32 %s21, %s33
      %s179 = ssub.s32 %s22, %s29
      %s180 = sor.u32 %s178, %s179
      %p181 = scmp.eq.s32.totalorder %s180, 0
      %s183 = sadd.s32 %s182, 1
      %s184 = scalar_select %p181, %s182, %s183
      %p187 = pneg %p181
      %p188 = scmp.eq.s32.totalorder %s14, 3
      %p189 = por %p187, %p188
      %p190 = scmp.ne.s32.totalorder %s182, %s185
      %p191 = scmp.eq.s32.totalorder %s14, 0
      %p192 = por %p190, %p191
      %p193 = scmp.ne.s32.totalorder %s182, %s185
      %p194 = scmp.eq.s32.totalorder %s19, 3
      %p195 = por %p193, %p194
      %p196 = scmp.ne.s32.totalorder %s185, %s186
      %p197 = scmp.eq.s32.totalorder %s19, 0
      %p198 = por %p196, %p197
      %p199 = scmp.ne.s32.totalorder %s185, %s186
      %p200 = scmp.eq.s32.totalorder %s20, 3
      %p201 = por %p199, %p200
      %p203 = scmp.ne.s32.totalorder %s186, %s202
      %p204 = scmp.eq.s32.totalorder %s20, 0
      %p205 = por %p203, %p204
      %s206 = ssub.s32 %s21, %s33
      %s207 = ssub.s32 %s22, %s29
      %s208 = sor.u32 %s206, %s207
      %p209 = scmp.eq.s32.totalorder %s208, 0
      %s211 = sadd.s32 %s210, 1
      %s212 = scalar_select %p209, %s210, %s211
      %p215 = pneg %p209
      %p216 = scmp.eq.s32.totalorder %s14, 3
      %p217 = por %p215, %p216
      %p218 = scmp.ne.s32.totalorder %s210, %s213
      %p219 = scmp.eq.s32.totalorder %s14, 0
      %p220 = por %p218, %p219
      %p221 = scmp.ne.s32.totalorder %s210, %s213
      %p222 = scmp.eq.s32.totalorder %s19, 3
      %p223 = por %p221, %p222
      %p224 = scmp.ne.s32.totalorder %s213, %s214
      %p225 = scmp.eq.s32.totalorder %s19, 0
      %p226 = por %p224, %p225
      %p227 = scmp.ne.s32.totalorder %s213, %s214
      %p228 = scmp.eq.s32.totalorder %s20, 3
      %p229 = por %p227, %p228
      %p231 = scmp.ne.s32.totalorder %s214, %s230
      %p232 = scmp.eq.s32.totalorder %s20, 0
      %p233 = por %p231, %p232
      %p234 = scmp.le.s32.totalorder 1, %s14
      %p235 = scmp.lt.s32.totalorder %s14, 5
      %p236 = pnand %p234, %p235
      %p237 = pneg %p236
      // Predicated region
      $region9: #{tpu_custom_call.1} parent=5 // pred_check
        _
      $region10: #{tpu_custom_call.1} parent=5 // pred_check_branch
        %239 = sbr.rel (%p236) target = $region12
      $region11: #{tpu_custom_call.1} parent=5 // pred_region
        %s240 = ssub.s32 %s14, 1
        // Predicated region
        $region13: #{tpu_custom_call.1} parent=11 // pred_check
          %p241 = pneg %p107
        $region14: #{tpu_custom_call.1} parent=11 // pred_check_branch
          %243 = sbr.rel (%p241) target = $region16
        $region15: #{tpu_custom_call.1} parent=11 // pred_region
          _
        $region16: #{tpu_custom_call.1} parent=11 // pred_fallthru
          _
        // Predicated region
        $region17: #{tpu_custom_call.1} parent=11 // pred_check
          %p244 = pneg %p128
        $region18: #{tpu_custom_call.1} parent=11 // pred_check_branch
          %246 = sbr.rel (%p244) target = $region20
        $region19: #{tpu_custom_call.1} parent=11 // pred_region
          _
        $region20: #{tpu_custom_call.1} parent=11 // pred_fallthru
          _
        // Predicated region
        $region21: #{tpu_custom_call.1} parent=11 // pred_check
          %p247 = pneg %p149
        $region22: #{tpu_custom_call.1} parent=11 // pred_check_branch
          %249 = sbr.rel (%p247) target = $region24
        $region23: #{tpu_custom_call.1} parent=11 // pred_region
          _
        $region24: #{tpu_custom_call.1} parent=11 // pred_fallthru
          _
        // Predicated region
        $region25: #{tpu_custom_call.1} parent=11 // pred_check
          %p250 = pneg %p170
        $region26: #{tpu_custom_call.1} parent=11 // pred_check_branch
          %252 = sbr.rel (%p250) target = $region28
        $region27: #{tpu_custom_call.1} parent=11 // pred_region
          _
        $region28: #{tpu_custom_call.1} parent=11 // pred_fallthru
          _
      $region12: #{tpu_custom_call.1} parent=5 // pred_fallthru
        _
      %p253 = scmp.lt.s32.totalorder %s14, 4
      // Predicated region
      $region29: #{tpu_custom_call.1} parent=5 // pred_check
        %p254 = pneg %p253
      $region30: #{tpu_custom_call.1} parent=5 // pred_check_branch
        %256 = sbr.rel (%p254) target = $region32
      $region31: #{tpu_custom_call.1} parent=5 // pred_region
        // Predicated region
        $region33: #{tpu_custom_call.1} parent=31 // pred_check
          %p257 = pneg %p48
        $region34: #{tpu_custom_call.1} parent=31 // pred_check_branch
          %259 = sbr.rel (%p257) target = $region36
        $region35: #{tpu_custom_call.1} parent=31 // pred_region
          %s260 = smul.u32 8, %s22
          %s261 = ssub.s32 18, %s260
          %p262 = scmp.lt.s32.totalorder %s261, 8
          %s263 = scalar_select %p262, %s261, 8
          %s264 = smul.u32 64, %s263
          %s265 = smul.u32 %s264, 3
          %p266 = scmp.lt.s32.totalorder %s21, 1
          %s267 = scalar_select %p266, %s21, 1
          %p268 = scmp.lt.s32.totalorder %s260, 17
          %s269 = scalar_select %p268, %s260, 17
          %s270 = smul.addr %s269, 3
          %s271 = smul.addr %s267, 54
          %s272 = sadd.s32 %s270, %s271
          %s273 = smul.addr %s272, 4
          %s274 = scalar_lea.vmem %s0, %s273
          %s275 = smul.u32 8, %s22
          %s276 = ssub.s32 18, %s275
          %p277 = scmp.lt.s32.totalorder %s276, 8
          %s278 = scalar_select %p277, %s276, 8
          %s279 = smul.u32 64, %s278
          %s280 = smul.u32 %s279, 3
        $region36: #{tpu_custom_call.1} parent=31 // pred_fallthru
          _
        // Predicated region
        $region37: #{tpu_custom_call.1} parent=31 // pred_check
          %p281 = pneg %p80
        $region38: #{tpu_custom_call.1} parent=31 // pred_check_branch
          %283 = sbr.rel (%p281) target = $region40
        $region39: #{tpu_custom_call.1} parent=31 // pred_region
          %s284 = sadd.s32 %s22, 1
          %s285 = smul.u32 %s284, 4
          %s286 = smul.u32 2, %s285
          %p287 = scmp.lt.s32.totalorder %s21, 1
          %s288 = scalar_select %p287, %s21, 1
          %p289 = scmp.lt.s32.totalorder %s286, 17
          %s290 = scalar_select %p289, %s286, 17
          %s291 = smul.addr %s290, 3
          %s292 = smul.addr %s288, 54
          %s293 = sadd.s32 %s291, %s292
          %s294 = smul.addr %s293, 4
          %s295 = scalar_lea.vmem %s1, %s294
          %s296 = sadd.s32 %s22, 1
          %s297 = smul.u32 %s296, 4
          %s298 = smul.u32 2, %s297
        $region40: #{tpu_custom_call.1} parent=31 // pred_fallthru
          _
      $region32: #{tpu_custom_call.1} parent=5 // pred_fallthru
        _
      %p299 = scmp.le.s32.totalorder 1, %s14
      %p300 = scmp.lt.s32.totalorder %s14, 5
      %p301 = pnand %p299, %p300
      %p302 = pneg %p301
      // Predicated region
      $region41: #{tpu_custom_call.1} parent=5 // pred_check
        _
      $region42: #{tpu_custom_call.1} parent=5 // pred_check_branch
        %304 = sbr.rel (%p301) target = $region44
      $region43: #{tpu_custom_call.1} parent=5 // pred_region
        %s305 = ssub.s32 %s14, 1
        %s306 = smul.u32 8, %s24
        %s307 = ssub.s32 18, %s306
        %p308 = scmp.lt.s32.totalorder %s307, 8
        %s309 = scalar_select %p308, %s307, 8
        %s310 = smul.u32 64, %s309
        %s311 = smul.u32 %s310, 3
        %p312 = scmp.lt.s32.totalorder %s23, 1
        %s313 = scalar_select %p312, %s23, 1
        %p314 = scmp.lt.s32.totalorder %s306, 17
        %s315 = scalar_select %p314, %s306, 17
        %s316 = smul.addr %s315, 3
        %s317 = smul.addr %s313, 54
        %s318 = sadd.s32 %s316, %s317
        %s319 = smul.addr %s318, 4
        %s320 = scalar_lea.vmem %s0, %s319
        %p321 = pneg %p54
        %p322 = pneg %p51
        %s323 = sadd.s32 %s24, 1
        %s324 = smul.u32 %s323, 4
        %s325 = smul.u32 2, %s324
        %p326 = scmp.lt.s32.totalorder %s23, 1
        %s327 = scalar_select %p326, %s23, 1
        %p328 = scmp.lt.s32.totalorder %s325, 17
        %s329 = scalar_select %p328, %s325, 17
        %s330 = smul.addr %s329, 3
        %s331 = smul.addr %s327, 54
        %s332 = sadd.s32 %s330, %s331
        %s333 = smul.addr %s332, 4
        %s334 = scalar_lea.vmem %s1, %s333
        %p335 = pneg %p86
        %p336 = pneg %p83
        %p337 = pneg %p107
        %p338 = pneg %p104
        %p339 = pneg %p128
        %p340 = pneg %p125
        %p341 = pneg %p149
        %p342 = pneg %p146
        %p343 = pneg %p170
        %p344 = pneg %p167
        %p345 = pneg %p198
        %p346 = pneg %p195
        %p347 = scmp.lt.s32.totalorder %s23, 1
        %s348 = scalar_select %p347, %s23, 1
        %p349 = scmp.lt.s32.totalorder %s24, 1
        %s350 = scalar_select %p349, %s24, 1
        %s351 = smul.addr %s348, 2
        %s352 = sadd.s32 %s350, %s351
        %s353 = smul.addr %s352, 4
        %s354 = scalar_lea.vmem %s6, %s353
        %p355 = pneg %p226
        %p356 = pneg %p223
        %s357 = sand.u32 %s213, 1
        %s358 = sand.u32 %s213, 1
        %s359 = smul.addr %s358, 16
        %s360 = scalar_lea.vmem [#allocation2], %s359
        %s361 = smul.u32 8, %s24
        %s362 = ssub.s32 18, %s361
        %p363 = scmp.lt.s32.totalorder %s362, 8
        %s364 = scalar_select %p363, %s362, 8
        %s365 = smul.u32 64, %s364
        %s366 = smul.u32 %s365, 3
        %p367 = scmp.lt.s32.totalorder %s23, 1
        %s368 = scalar_select %p367, %s23, 1
        %p369 = scmp.lt.s32.totalorder %s361, 17
        %s370 = scalar_select %p369, %s361, 17
        %s371 = smul.addr %s370, 3
        %s372 = smul.addr %s368, 54
        %s373 = sadd.s32 %s371, %s372
        %s374 = smul.addr %s373, 4
        %s375 = scalar_lea.vmem %s0, %s374
        %s376 = smul.u32 8, %s24
        %s377 = ssub.s32 18, %s376
        %p378 = scmp.lt.s32.totalorder %s377, 8
        %s379 = scalar_select %p378, %s377, 8
        %s380 = smul.u32 64, %s379
        %s381 = smul.u32 %s380, 3
        %s382 = sadd.s32 %s24, 1
        %s383 = smul.u32 %s382, 4
        %s384 = smul.u32 2, %s383
        %p385 = scmp.lt.s32.totalorder %s23, 1
        %s386 = scalar_select %p385, %s23, 1
        %p387 = scmp.lt.s32.totalorder %s384, 17
        %s388 = scalar_select %p387, %s384, 17
        %s389 = smul.addr %s388, 3
        %s390 = smul.addr %s386, 54
        %s391 = sadd.s32 %s389, %s390
        %s392 = smul.addr %s391, 4
        %s393 = scalar_lea.vmem %s1, %s392
        %s394 = sadd.s32 %s24, 1
        %s395 = smul.u32 %s394, 4
        %s396 = smul.u32 2, %s395
        %p397 = scmp.lt.s32.totalorder %s23, 1
        %s398 = scalar_select %p397, %s23, 1
        %p399 = scmp.lt.s32.totalorder %s24, 1
        %s400 = scalar_select %p399, %s24, 1
        %s401 = smul.addr %s398, 2
        %s402 = sadd.s32 %s400, %s401
        %s403 = smul.addr %s402, 4
        %s404 = scalar_lea.vmem %s6, %s403
        %v406 = vld [vmem:[%s375] sm:$0xf]
        %v407 = vld [vmem:[%s375 + $0x4] sm:$0xf]
        %v408 = vld [vmem:[%s375 + $0x8] sm:$0x1]
        %v409 = vld [vmem:[%s375 + $0xc] sm:$0xf]
        %v410 = vld [vmem:[%s375 + $0x10] sm:$0xf]
        %v411 = vld [vmem:[%s375 + $0x14] sm:$0x1]
        %v412 = vld [vmem:[%s375 + $0x18] sm:$0xf]
        %v413 = vld [vmem:[%s375 + $0x1c] sm:$0xf]
        %v414 = vld [vmem:[%s375 + $0x20] sm:$0x1]
        %v415 = vld [vmem:[%s375 + $0x24] sm:$0xf]
        %v416 = vld [vmem:[%s375 + $0x28] sm:$0xf]
        %v417 = vld [vmem:[%s375 + $0x2c] sm:$0x1]
        %v418 = vld [vmem:[%s375 + $0x30] sm:$0xf]
        %v419 = vld [vmem:[%s375 + $0x34] sm:$0xf]
        %v420 = vld [vmem:[%s375 + $0x38] sm:$0x1]
        %v421 = vld [vmem:[%s375 + $0x3c] sm:$0xf]
        %v422 = vld [vmem:[%s375 + $0x40] sm:$0xf]
        %v423 = vld [vmem:[%s375 + $0x44] sm:$0x1]
        %v424 = vld [vmem:[%s375 + $0x48] sm:$0xf]
        %v425 = vld [vmem:[%s375 + $0x4c] sm:$0xf]
        %v426 = vld [vmem:[%s375 + $0x50] sm:$0x1]
        %v427 = vld [vmem:[%s375 + $0x54] sm:$0xf]
        %v428 = vld [vmem:[%s375 + $0x58] sm:$0xf]
        %v429 = vld [vmem:[%s375 + $0x5c] sm:$0x1]
        %v430 = vld [vmem:[%s393] sm:$0xf]
        %v431 = vld [vmem:[%s393 + $0x4] sm:$0xf]
        %v432 = vld [vmem:[%s393 + $0x8] sm:$0x1]
        %v433 = vld [vmem:[%s393 + $0xc] sm:$0xf]
        %v434 = vld [vmem:[%s393 + $0x10] sm:$0xf]
        %v435 = vld [vmem:[%s393 + $0x14] sm:$0x1]
        %v452 = vunpack.c.l.b16 %v406
        %v453 = vunpack.c.l.b16 %v407
        %v454 = vunpack.c.l.b16 %v409
        %v455 = vunpack.c.l.b16 %v410
        %v456 = vunpack.c.l.b16 %v412
        %v457 = vunpack.c.l.b16 %v413
        %v458 = vunpack.c.l.b16 %v415
        %v459 = vunpack.c.l.b16 %v416
        %v460 = vunpack.c.l.b16 %v418
        %v461 = vunpack.c.l.b16 %v419
        %v462 = vunpack.c.l.b16 %v421
        %v463 = vunpack.c.l.b16 %v422
        %v464 = vunpack.c.l.b16 %v424
        %v465 = vunpack.c.l.b16 %v425
        %v466 = vunpack.c.l.b16 %v427
        %v467 = vunpack.c.l.b16 %v428
        %v468 = vpack.c.b16 %v453, %v452
        %v469 = vpack.c.b16 %v455, %v454
        %v470 = vpack.c.b16 %v457, %v456
        %v471 = vpack.c.b16 %v459, %v458
        %v472 = vpack.c.b16 %v461, %v460
        %v473 = vpack.c.b16 %v463, %v462
        %v474 = vpack.c.b16 %v465, %v464
        %v475 = vpack.c.b16 %v467, %v466
        %v478 = vunpack.c.l.b16 %v430
        %v479 = vunpack.c.l.b16 %v431
        %v480 = vpack.c.b16 %v479, %v478
        %481 = vrot.lane.b32.xlu0 %v469, 4
        %v482 = vpop.permute.xlu0 %481
        %483 = vrot.lane.b32.xlu0 %v470, 4
        %v484 = vpop.permute.xlu0 %483
        %485 = vrot.lane.b32.xlu0 %v471, 4
        %v486 = vpop.permute.xlu0 %485
        %487 = vrot.lane.b32.xlu0 %v472, 4
        %v488 = vpop.permute.xlu0 %487
        %489 = vrot.lane.b32.xlu0 %v473, 4
        %v490 = vpop.permute.xlu0 %489
        %491 = vrot.lane.b32.xlu0 %v474, 4
        %v492 = vpop.permute.xlu0 %491
        %493 = vrot.lane.b32.xlu0 %v475, 4
        %v494 = vpop.permute.xlu0 %493
        %495 = vrot.lane.b32.xlu0 %v480, 4
        %v496 = vpop.permute.xlu0 %495
        %v499 = vunpack.c.l.b16 %v433
        %v500 = vunpack.c.l.b16 %v434
        %v501 = vpack.c.b16 %v500, %v499
        %502 = vrot.lane.b32.xlu0 %v470, 8
        %v503 = vpop.permute.xlu0 %502
        %504 = vrot.lane.b32.xlu0 %v471, 8
        %v505 = vpop.permute.xlu0 %504
        %506 = vrot.lane.b32.xlu0 %v472, 8
        %v507 = vpop.permute.xlu0 %506
        %508 = vrot.lane.b32.xlu0 %v473, 8
        %v509 = vpop.permute.xlu0 %508
        %510 = vrot.lane.b32.xlu0 %v474, 8
        %v511 = vpop.permute.xlu0 %510
        %512 = vrot.lane.b32.xlu0 %v475, 8
        %v513 = vpop.permute.xlu0 %512
        %514 = vrot.lane.b32.xlu0 %v480, 8
        %v515 = vpop.permute.xlu0 %514
        %516 = vrot.lane.b32.xlu0 %v501, 8
        %v517 = vpop.permute.xlu0 %516
        %vm518 = vcmask 31744
        %v521 = vsel %vm518, %v468, %v482
        %v524 = vsel %vm518, %v469, %v484
        %v527 = vsel %vm518, %v470, %v486
        %v530 = vsel %vm518, %v471, %v488
        %v533 = vsel %vm518, %v472, %v490
        %v536 = vsel %vm518, %v473, %v492
        %v539 = vsel %vm518, %v474, %v494
        %v542 = vsel %vm518, %v475, %v496
        %vm543 = vcmask 64512
        %v545 = vsel %vm543, %v521, %v503
        %v547 = vsel %vm543, %v524, %v505
        %v549 = vsel %vm543, %v527, %v507
        %v551 = vsel %vm543, %v530, %v509
        %v553 = vsel %vm543, %v533, %v511
        %v555 = vsel %vm543, %v536, %v513
        %v557 = vsel %vm543, %v539, %v515
        %v559 = vsel %vm543, %v542, %v517
        %v560 = vld [vmem:[%s2] sm:$0xf]
        %v561 = vld [vmem:[%s2 + $0x4] sm:$0x3]
        %v570 = vunpack.c.l.b16 %v408
        %v571 = vunpack.c.l.b16 %v411
        %v572 = vunpack.c.l.b16 %v414
        %v573 = vunpack.c.l.b16 %v417
        %v574 = vunpack.c.l.b16 %v420
        %v575 = vunpack.c.l.b16 %v423
        %v576 = vunpack.c.l.b16 %v426
        %v577 = vunpack.c.l.b16 %v429
        %v578 = vpack.c.b16 %v570, %v570
        %v579 = vpack.c.b16 %v571, %v571
        %v580 = vpack.c.b16 %v572, %v572
        %v581 = vpack.c.b16 %v573, %v573
        %v582 = vpack.c.b16 %v574, %v574
        %v583 = vpack.c.b16 %v575, %v575
        %v584 = vpack.c.b16 %v576, %v576
        %v585 = vpack.c.b16 %v577, %v577
        %v587 = vunpack.c.l.b16 %v432
        %v588 = vpack.c.b16 %v587, %v587
        %589 = vrot.lane.b32.xlu0 %v579, 4
        %v590 = vpop.permute.xlu0 %589
        %591 = vrot.lane.b32.xlu0 %v580, 4
        %v592 = vpop.permute.xlu0 %591
        %593 = vrot.lane.b32.xlu0 %v581, 4
        %v594 = vpop.permute.xlu0 %593
        %595 = vrot.lane.b32.xlu0 %v582, 4
        %v596 = vpop.permute.xlu0 %595
        %597 = vrot.lane.b32.xlu0 %v583, 4
        %v598 = vpop.permute.xlu0 %597
        %599 = vrot.lane.b32.xlu0 %v584, 4
        %v600 = vpop.permute.xlu0 %599
        %601 = vrot.lane.b32.xlu0 %v585, 4
        %v602 = vpop.permute.xlu0 %601
        %603 = vrot.lane.b32.xlu0 %v588, 4
        %v604 = vpop.permute.xlu0 %603
        %v606 = vunpack.c.l.b16 %v435
        %v607 = vpack.c.b16 %v606, %v606
        %608 = vrot.lane.b32.xlu0 %v580, 8
        %v609 = vpop.permute.xlu0 %608
        %610 = vrot.lane.b32.xlu0 %v581, 8
        %v611 = vpop.permute.xlu0 %610
        %612 = vrot.lane.b32.xlu0 %v582, 8
        %v613 = vpop.permute.xlu0 %612
        %614 = vrot.lane.b32.xlu0 %v583, 8
        %v615 = vpop.permute.xlu0 %614
        %616 = vrot.lane.b32.xlu0 %v584, 8
        %v617 = vpop.permute.xlu0 %616
        %618 = vrot.lane.b32.xlu0 %v585, 8
        %v619 = vpop.permute.xlu0 %618
        %620 = vrot.lane.b32.xlu0 %v588, 8
        %v621 = vpop.permute.xlu0 %620
        %622 = vrot.lane.b32.xlu0 %v607, 8
        %v623 = vpop.permute.xlu0 %622
        %v626 = vsel %vm518, %v578, %v590
        %v629 = vsel %vm518, %v579, %v592
        %v632 = vsel %vm518, %v580, %v594
        %v635 = vsel %vm518, %v581, %v596
        %v638 = vsel %vm518, %v582, %v598
        %v641 = vsel %vm518, %v583, %v600
        %v644 = vsel %vm518, %v584, %v602
        %v647 = vsel %vm518, %v585, %v604
        %v649 = vsel %vm543, %v626, %v609
        %v651 = vsel %vm543, %v629, %v611
        %v653 = vsel %vm543, %v632, %v613
        %v655 = vsel %vm543, %v635, %v615
        %v657 = vsel %vm543, %v638, %v617
        %v659 = vsel %vm543, %v641, %v619
        %v661 = vsel %vm543, %v644, %v621
        %v663 = vsel %vm543, %v647, %v623
        %vm664 = vsmask.f32 7424
        %v665 = vshrl.u32 %v545, 16
        %v667 = vshll.u32 %v545, 16
        %v669 = vrot.slane %v667, 1
        %v670 = vor.u32 %v665, %v669
        %v671 = vshll.u32 %v649, 16
        %v673 = vrot.slane %v671, 1
        %v674 = vsel %vm664, %v670, %v673
        %v675 = vshrl.u32 %v547, 16
        %v677 = vshll.u32 %v547, 16
        %v679 = vrot.slane %v677, 1
        %v680 = vor.u32 %v675, %v679
        %v681 = vshll.u32 %v651, 16
        %v683 = vrot.slane %v681, 1
        %v684 = vsel %vm664, %v680, %v683
        %v685 = vshrl.u32 %v549, 16
        %v687 = vshll.u32 %v549, 16
        %v689 = vrot.slane %v687, 1
        %v690 = vor.u32 %v685, %v689
        %v691 = vshll.u32 %v653, 16
        %v693 = vrot.slane %v691, 1
        %v694 = vsel %vm664, %v690, %v693
        %v695 = vshrl.u32 %v551, 16
        %v697 = vshll.u32 %v551, 16
        %v699 = vrot.slane %v697, 1
        %v700 = vor.u32 %v695, %v699
        %v701 = vshll.u32 %v655, 16
        %v703 = vrot.slane %v701, 1
        %v704 = vsel %vm664, %v700, %v703
        %v705 = vshrl.u32 %v553, 16
        %v707 = vshll.u32 %v553, 16
        %v709 = vrot.slane %v707, 1
        %v710 = vor.u32 %v705, %v709
        %v711 = vshll.u32 %v657, 16
        %v713 = vrot.slane %v711, 1
        %v714 = vsel %vm664, %v710, %v713
        %v715 = vshrl.u32 %v555, 16
        %v717 = vshll.u32 %v555, 16
        %v719 = vrot.slane %v717, 1
        %v720 = vor.u32 %v715, %v719
        %v721 = vshll.u32 %v659, 16
        %v723 = vrot.slane %v721, 1
        %v724 = vsel %vm664, %v720, %v723
        %v725 = vshrl.u32 %v557, 16
        %v727 = vshll.u32 %v557, 16
        %v729 = vrot.slane %v727, 1
        %v730 = vor.u32 %v725, %v729
        %v731 = vshll.u32 %v661, 16
        %v733 = vrot.slane %v731, 1
        %v734 = vsel %vm664, %v730, %v733
        %v735 = vshrl.u32 %v559, 16
        %v737 = vshll.u32 %v559, 16
        %v739 = vrot.slane %v737, 1
        %v740 = vor.u32 %v735, %v739
        %v741 = vshll.u32 %v663, 16
        %v743 = vrot.slane %v741, 1
        %v744 = vsel %vm664, %v740, %v743
        %s745 = scalar_lea.vmem %s2, 8
        %v746 = vld [vmem:[%s745] sm:$0xf]
        %v747 = vld [vmem:[%s745 + $0x4] sm:$0x3]
        %v750 = vunpack.c.l.b16 %v746
        %v751 = vunpack.c.l.b16 %v747
        %v752 = vpack.c.b16 %v751, %v750
        %vm753 = vcmask 97280
        %v755 = vsel %vm753, %v674, 0
        %v758 = vsel %vm753, %v684, 0
        %v761 = vsel %vm753, %v694, 0
        %v764 = vsel %vm753, %v704, 0
        %v767 = vsel %vm753, %v714, 0
        %v770 = vsel %vm753, %v724, 0
        %v773 = vsel %vm753, %v734, 0
        %v776 = vsel %vm753, %v744, 0
        %vm778 = vcmask 1045504
        %v780 = vsel %vm778, %v752, 0
        %782 = vmatprep.subr.bf16.mxu0 0
        %783 = vmatpush1.bf16.msra.mxu0 %v780
        %784 = vmatprep.subr.bf16.mxu0 0
        %785 = vmatpush1.bf16.msra.mxu0 0
        %786 = vmatprep.subr.bf16.mxu0 0
        %787 = vmatpush1.bf16.msra.mxu0 0
        %788 = vmatprep.subr.bf16.mxu0 0
        %789 = vmatpush1.bf16.msra.mxu0 0
        %790 = vmatprep.subr.bf16.mxu0 0
        %791 = vmatpush1.bf16.msra.mxu0 0
        %792 = vmatprep.subr.bf16.mxu0 0
        %793 = vmatpush1.bf16.msra.mxu0 0
        %794 = vmatprep.subr.bf16.mxu0 0
        %795 = vmatpush1.bf16.msra.mxu0 0
        %796 = vmatprep.subr.bf16.mxu0 0
        %797 = vmatpush1.bf16.msra.mxu0 0
        %798 = vmatprep.subr.bf16.mxu0 0
        %799 = vmatpush1.bf16.msra.mxu0 0
        %800 = vmatprep.subr.bf16.mxu0 0
        %801 = vmatpush1.bf16.msra.mxu0 0
        %802 = vmatprep.subr.bf16.mxu0 0
        %803 = vmatpush1.bf16.msra.mxu0 0
        %804 = vmatprep.subr.bf16.mxu0 0
        %805 = vmatpush1.bf16.msra.mxu0 0
        %806 = vmatprep.subr.bf16.mxu0 0
        %807 = vmatpush1.bf16.msra.mxu0 0
        %808 = vmatprep.subr.bf16.mxu0 0
        %809 = vmatpush1.bf16.msra.mxu0 0
        %810 = vmatprep.subr.bf16.mxu0 0
        %811 = vmatpush1.bf16.msra.mxu0 0
        %812 = vmatprep.subr.bf16.mxu0 0
        %813 = vmatpush1.bf16.msra.mxu0 0
        %814 = vmatprep.mubr.bf16.mxu0 0
        %815 = vmatmul.mubr.bf16.gmra.mrb[0].mxu0 %v755
        %v816 = vpop.f32.mrb[0].mxu0
        %v817 = vadd.f32 0.0, %v816
        %v818 = vpop.f32.mrb[0].mxu0
        %v819 = vpop.f32.mrb[0].mxu0
        %v820 = vadd.f32 0.0, %v819
        %v821 = vpop.f32.mrb[0].mxu0
        %822 = vmatprep.mubr.bf16.mxu0 0
        %823 = vmatmul.mubr.bf16.gmra.mrb[0].mxu0 %v758
        %v824 = vpop.f32.mrb[0].mxu0
        %v825 = vadd.f32 0.0, %v824
        %v826 = vpop.f32.mrb[0].mxu0
        %v827 = vpop.f32.mrb[0].mxu0
        %v828 = vadd.f32 0.0, %v827
        %v829 = vpop.f32.mrb[0].mxu0
        %830 = vmatprep.mubr.bf16.mxu0 0
        %831 = vmatmul.mubr.bf16.gmra.mrb[0].mxu0 %v761
        %v832 = vpop.f32.mrb[0].mxu0
        %v833 = vadd.f32 0.0, %v832
        %v834 = vpop.f32.mrb[0].mxu0
        %v835 = vpop.f32.mrb[0].mxu0
        %v836 = vadd.f32 0.0, %v835
        %v837 = vpop.f32.mrb[0].mxu0
        %838 = vmatprep.mubr.bf16.mxu0 0
        %839 = vmatmul.mubr.bf16.gmra.mrb[0].mxu0 %v764
        %v840 = vpop.f32.mrb[0].mxu0
        %v841 = vadd.f32 0.0, %v840
        %v842 = vpop.f32.mrb[0].mxu0
        %v843 = vpop.f32.mrb[0].mxu0
        %v844 = vadd.f32 0.0, %v843
        %v845 = vpop.f32.mrb[0].mxu0
        %846 = vmatprep.mubr.bf16.mxu0 0
        %847 = vmatmul.mubr.bf16.gmra.mrb[0].mxu0 %v767
        %v848 = vpop.f32.mrb[0].mxu0
        %v849 = vadd.f32 0.0, %v848
        %v850 = vpop.f32.mrb[0].mxu0
        %v851 = vpop.f32.mrb[0].mxu0
        %v852 = vadd.f32 0.0, %v851
        %v853 = vpop.f32.mrb[0].mxu0
        %854 = vmatprep.mubr.bf16.mxu0 0
        %855 = vmatmul.mubr.bf16.gmra.mrb[0].mxu0 %v770
        %v856 = vpop.f32.mrb[0].mxu0
        %v857 = vadd.f32 0.0, %v856
        %v858 = vpop.f32.mrb[0].mxu0
        %v859 = vpop.f32.mrb[0].mxu0
        %v860 = vadd.f32 0.0, %v859
        %v861 = vpop.f32.mrb[0].mxu0
        %862 = vmatprep.mubr.bf16.mxu0 0
        %863 = vmatmul.mubr.bf16.gmra.mrb[0].mxu0 %v773
        %v864 = vpop.f32.mrb[0].mxu0
        %v865 = vadd.f32 0.0, %v864
        %v866 = vpop.f32.mrb[0].mxu0
        %v867 = vpop.f32.mrb[0].mxu0
        %v868 = vadd.f32 0.0, %v867
        %v869 = vpop.f32.mrb[0].mxu0
        %870 = vmatprep.mubr.bf16.mxu0 0
        %871 = vmatmul.mubr.bf16.gmra.mrb[0].mxu0 %v776
        %v872 = vpop.f32.mrb[0].mxu0
        %v873 = vadd.f32 0.0, %v872
        %v874 = vpop.f32.mrb[0].mxu0
        %v875 = vpop.f32.mrb[0].mxu0
        %v876 = vadd.f32 0.0, %v875
        %v877 = vpop.f32.mrb[0].mxu0
        %878 = vdwg.mxu0
        %v881 = vunpack.c.l.b16 %v560
        %v882 = vunpack.c.l.b16 %v561
        %v883 = vpack.c.b16 %v882, %v881
        %v884 = vsel %vm753, %v545, 0
        %v886 = vsel %vm753, %v547, 0
        %v888 = vsel %vm753, %v549, 0
        %v890 = vsel %vm753, %v551, 0
        %v892 = vsel %vm753, %v553, 0
        %v894 = vsel %vm753, %v555, 0
        %v896 = vsel %vm753, %v557, 0
        %v898 = vsel %vm753, %v559, 0
        %v901 = vsel %vm778, %v883, 0
        %903 = vmatprep.subr.bf16.mxu0 0
        %904 = vmatpush1.bf16.msra.mxu0 %v901
        %905 = vmatprep.subr.bf16.mxu0 0
        %906 = vmatpush1.bf16.msra.mxu0 0
        %907 = vmatprep.subr.bf16.mxu0 0
        %908 = vmatpush1.bf16.msra.mxu0 0
        %909 = vmatprep.subr.bf16.mxu0 0
        %910 = vmatpush1.bf16.msra.mxu0 0
        %911 = vmatprep.subr.bf16.mxu0 0
        %912 = vmatpush1.bf16.msra.mxu0 0
        %913 = vmatprep.subr.bf16.mxu0 0
        %914 = vmatpush1.bf16.msra.mxu0 0
        %915 = vmatprep.subr.bf16.mxu0 0
        %916 = vmatpush1.bf16.msra.mxu0 0
        %917 = vmatprep.subr.bf16.mxu0 0
        %918 = vmatpush1.bf16.msra.mxu0 0
        %919 = vmatprep.subr.bf16.mxu0 0
        %920 = vmatpush1.bf16.msra.mxu0 0
        %921 = vmatprep.subr.bf16.mxu0 0
        %922 = vmatpush1.bf16.msra.mxu0 0
        %923 = vmatprep.subr.bf16.mxu0 0
        %924 = vmatpush1.bf16.msra.mxu0 0
        %925 = vmatprep.subr.bf16.mxu0 0
        %926 = vmatpush1.bf16.msra.mxu0 0
        %927 = vmatprep.subr.bf16.mxu0 0
        %928 = vmatpush1.bf16.msra.mxu0 0
        %929 = vmatprep.subr.bf16.mxu0 0
        %930 = vmatpush1.bf16.msra.mxu0 0
        %931 = vmatprep.subr.bf16.mxu0 0
        %932 = vmatpush1.bf16.msra.mxu0 0
        %933 = vmatprep.subr.bf16.mxu0 0
        %934 = vmatpush1.bf16.msra.mxu0 0
        %935 = vmatprep.mubr.bf16.mxu0 0
        %936 = vmatmul.mubr.bf16.gmra.mrb[0].mxu0 %v884
        %v937 = vpop.f32.mrb[0].mxu0
        %v938 = vadd.f32 %v817, %v937
        %v939 = vpop.f32.mrb[0].mxu0
        %v940 = vpop.f32.mrb[0].mxu0
        %v941 = vadd.f32 %v820, %v940
        %v942 = vpop.f32.mrb[0].mxu0
        %943 = vmatprep.mubr.bf16.mxu0 0
        %944 = vmatmul.mubr.bf16.gmra.mrb[0].mxu0 %v886
        %v945 = vpop.f32.mrb[0].mxu0
        %v946 = vadd.f32 %v825, %v945
        %v947 = vpop.f32.mrb[0].mxu0
        %v948 = vpop.f32.mrb[0].mxu0
        %v949 = vadd.f32 %v828, %v948
        %v950 = vpop.f32.mrb[0].mxu0
        %951 = vmatprep.mubr.bf16.mxu0 0
        %952 = vmatmul.mubr.bf16.gmra.mrb[0].mxu0 %v888
        %v953 = vpop.f32.mrb[0].mxu0
        %v954 = vadd.f32 %v833, %v953
        %v955 = vpop.f32.mrb[0].mxu0
        %v956 = vpop.f32.mrb[0].mxu0
        %v957 = vadd.f32 %v836, %v956
        %v958 = vpop.f32.mrb[0].mxu0
        %959 = vmatprep.mubr.bf16.mxu0 0
        %960 = vmatmul.mubr.bf16.gmra.mrb[0].mxu0 %v890
        %v961 = vpop.f32.mrb[0].mxu0
        %v962 = vadd.f32 %v841, %v961
        %v963 = vpop.f32.mrb[0].mxu0
        %v964 = vpop.f32.mrb[0].mxu0
        %v965 = vadd.f32 %v844, %v964
        %v966 = vpop.f32.mrb[0].mxu0
        %967 = vmatprep.mubr.bf16.mxu0 0
        %968 = vmatmul.mubr.bf16.gmra.mrb[0].mxu0 %v892
        %v969 = vpop.f32.mrb[0].mxu0
        %v970 = vadd.f32 %v849, %v969
        %v971 = vpop.f32.mrb[0].mxu0
        %v972 = vpop.f32.mrb[0].mxu0
        %v973 = vadd.f32 %v852, %v972
        %v974 = vpop.f32.mrb[0].mxu0
        %975 = vmatprep.mubr.bf16.mxu0 0
        %976 = vmatmul.mubr.bf16.gmra.mrb[0].mxu0 %v894
        %v977 = vpop.f32.mrb[0].mxu0
        %v978 = vadd.f32 %v857, %v977
        %v979 = vpop.f32.mrb[0].mxu0
        %v980 = vpop.f32.mrb[0].mxu0
        %v981 = vadd.f32 %v860, %v980
        %v982 = vpop.f32.mrb[0].mxu0
        %983 = vmatprep.mubr.bf16.mxu0 0
        %984 = vmatmul.mubr.bf16.gmra.mrb[0].mxu0 %v896
        %v985 = vpop.f32.mrb[0].mxu0
        %v986 = vadd.f32 %v865, %v985
        %v987 = vpop.f32.mrb[0].mxu0
        %v988 = vpop.f32.mrb[0].mxu0
        %v989 = vadd.f32 %v868, %v988
        %v990 = vpop.f32.mrb[0].mxu0
        %991 = vmatprep.mubr.bf16.mxu0 0
        %992 = vmatmul.mubr.bf16.gmra.mrb[0].mxu0 %v898
        %v993 = vpop.f32.mrb[0].mxu0
        %v994 = vadd.f32 %v873, %v993
        %v995 = vpop.f32.mrb[0].mxu0
        %v996 = vpop.f32.mrb[0].mxu0
        %v997 = vadd.f32 %v876, %v996
        %v998 = vpop.f32.mrb[0].mxu0
        %999 = vdwg.mxu0
        %vm1016 = vcmask 1046528
        %v1017 = vrot.slane %v545, 1
        %v1018 = vrot.slane %v649, 1
        %v1019 = vsel %vm1016, %v1017, %v1018
        %v1020 = vrot.slane %v547, 1
        %v1021 = vrot.slane %v651, 1
        %v1022 = vsel %vm1016, %v1020, %v1021
        %v1023 = vrot.slane %v549, 1
        %v1024 = vrot.slane %v653, 1
        %v1025 = vsel %vm1016, %v1023, %v1024
        %v1026 = vrot.slane %v551, 1
        %v1027 = vrot.slane %v655, 1
        %v1028 = vsel %vm1016, %v1026, %v1027
        %v1029 = vrot.slane %v553, 1
        %v1030 = vrot.slane %v657, 1
        %v1031 = vsel %vm1016, %v1029, %v1030
        %v1032 = vrot.slane %v555, 1
        %v1033 = vrot.slane %v659, 1
        %v1034 = vsel %vm1016, %v1032, %v1033
        %v1035 = vrot.slane %v557, 1
        %v1036 = vrot.slane %v661, 1
        %v1037 = vsel %vm1016, %v1035, %v1036
        %v1038 = vrot.slane %v559, 1
        %v1039 = vrot.slane %v663, 1
        %v1040 = vsel %vm1016, %v1038, %v1039
        %s1041 = scalar_lea.vmem %s2, 16
        %v1042 = vld [vmem:[%s1041] sm:$0xf]
        %v1043 = vld [vmem:[%s1041 + $0x4] sm:$0x3]
        %v1046 = vunpack.c.l.b16 %v1042
        %v1047 = vunpack.c.l.b16 %v1043
        %v1048 = vpack.c.b16 %v1047, %v1046
        %v1050 = vsel %vm753, %v1019, 0
        %v1053 = vsel %vm753, %v1022, 0
        %v1056 = vsel %vm753, %v1025, 0
        %v1059 = vsel %vm753, %v1028, 0
        %v1062 = vsel %vm753, %v1031, 0
        %v1065 = vsel %vm753, %v1034, 0
        %v1068 = vsel %vm753, %v1037, 0
        %v1071 = vsel %vm753, %v1040, 0
        %v1074 = vsel %vm778, %v1048, 0
        %1076 = vmatprep.subr.bf16.mxu0 0
        %1077 = vmatpush1.bf16.msra.mxu0 %v1074
        %1078 = vmatprep.subr.bf16.mxu0 0
        %1079 = vmatpush1.bf16.msra.mxu0 0
        %1080 = vmatprep.subr.bf16.mxu0 0
        %1081 = vmatpush1.bf16.msra.mxu0 0
        %1082 = vmatprep.subr.bf16.mxu0 0
        %1083 = vmatpush1.bf16.msra.mxu0 0
        %1084 = vmatprep.subr.bf16.mxu0 0
        %1085 = vmatpush1.bf16.msra.mxu0 0
        %1086 = vmatprep.subr.bf16.mxu0 0
        %1087 = vmatpush1.bf16.msra.mxu0 0
        %1088 = vmatprep.subr.bf16.mxu0 0
        %1089 = vmatpush1.bf16.msra.mxu0 0
        %1090 = vmatprep.subr.bf16.mxu0 0
        %1091 = vmatpush1.bf16.msra.mxu0 0
        %1092 = vmatprep.subr.bf16.mxu0 0
        %1093 = vmatpush1.bf16.msra.mxu0 0
        %1094 = vmatprep.subr.bf16.mxu0 0
        %1095 = vmatpush1.bf16.msra.mxu0 0
        %1096 = vmatprep.subr.bf16.mxu0 0
        %1097 = vmatpush1.bf16.msra.mxu0 0
        %1098 = vmatprep.subr.bf16.mxu0 0
        %1099 = vmatpush1.bf16.msra.mxu0 0
        %1100 = vmatprep.subr.bf16.mxu0 0
        %1101 = vmatpush1.bf16.msra.mxu0 0
        %1102 = vmatprep.subr.bf16.mxu0 0
        %1103 = vmatpush1.bf16.msra.mxu0 0
        %1104 = vmatprep.subr.bf16.mxu0 0
        %1105 = vmatpush1.bf16.msra.mxu0 0
        %1106 = vmatprep.subr.bf16.mxu0 0
        %1107 = vmatpush1.bf16.msra.mxu0 0
        %1108 = vmatprep.mubr.bf16.mxu0 0
        %1109 = vmatmul.mubr.bf16.gmra.mrb[0].mxu0 %v1050
        %v1110 = vpop.f32.mrb[0].mxu0
        %v1111 = vadd.f32 0.0, %v1110
        %v1112 = vpop.f32.mrb[0].mxu0
        %v1113 = vpop.f32.mrb[0].mxu0
        %v1114 = vadd.f32 0.0, %v1113
        %v1115 = vpop.f32.mrb[0].mxu0
        %1116 = vmatprep.mubr.bf16.mxu0 0
        %1117 = vmatmul.mubr.bf16.gmra.mrb[0].mxu0 %v1053
        %v1118 = vpop.f32.mrb[0].mxu0
        %v1119 = vadd.f32 0.0, %v1118
        %v1120 = vpop.f32.mrb[0].mxu0
        %v1121 = vpop.f32.mrb[0].mxu0
        %v1122 = vadd.f32 0.0, %v1121
        %v1123 = vpop.f32.mrb[0].mxu0
        %1124 = vmatprep.mubr.bf16.mxu0 0
        %1125 = vmatmul.mubr.bf16.gmra.mrb[0].mxu0 %v1056
        %v1126 = vpop.f32.mrb[0].mxu0
        %v1127 = vadd.f32 0.0, %v1126
        %v1128 = vpop.f32.mrb[0].mxu0
        %v1129 = vpop.f32.mrb[0].mxu0
        %v1130 = vadd.f32 0.0, %v1129
        %v1131 = vpop.f32.mrb[0].mxu0
        %1132 = vmatprep.mubr.bf16.mxu0 0
        %1133 = vmatmul.mubr.bf16.gmra.mrb[0].mxu0 %v1059
        %v1134 = vpop.f32.mrb[0].mxu0
        %v1135 = vadd.f32 0.0, %v1134
        %v1136 = vpop.f32.mrb[0].mxu0
        %v1137 = vpop.f32.mrb[0].mxu0
        %v1138 = vadd.f32 0.0, %v1137
        %v1139 = vpop.f32.mrb[0].mxu0
        %1140 = vmatprep.mubr.bf16.mxu0 0
        %1141 = vmatmul.mubr.bf16.gmra.mrb[0].mxu0 %v1062
        %v1142 = vpop.f32.mrb[0].mxu0
        %v1143 = vadd.f32 0.0, %v1142
        %v1144 = vpop.f32.mrb[0].mxu0
        %v1145 = vpop.f32.mrb[0].mxu0
        %v1146 = vadd.f32 0.0, %v1145
        %v1147 = vpop.f32.mrb[0].mxu0
        %1148 = vmatprep.mubr.bf16.mxu0 0
        %1149 = vmatmul.mubr.bf16.gmra.mrb[0].mxu0 %v1065
        %v1150 = vpop.f32.mrb[0].mxu0
        %v1151 = vadd.f32 0.0, %v1150
        %v1152 = vpop.f32.mrb[0].mxu0
        %v1153 = vpop.f32.mrb[0].mxu0
        %v1154 = vadd.f32 0.0, %v1153
        %v1155 = vpop.f32.mrb[0].mxu0
        %1156 = vmatprep.mubr.bf16.mxu0 0
        %1157 = vmatmul.mubr.bf16.gmra.mrb[0].mxu0 %v1068
        %v1158 = vpop.f32.mrb[0].mxu0
        %v1159 = vadd.f32 0.0, %v1158
        %v1160 = vpop.f32.mrb[0].mxu0
        %v1161 = vpop.f32.mrb[0].mxu0
        %v1162 = vadd.f32 0.0, %v1161
        %v1163 = vpop.f32.mrb[0].mxu0
        %1164 = vmatprep.mubr.bf16.mxu0 0
        %1165 = vmatmul.mubr.bf16.gmra.mrb[0].mxu0 %v1071
        %v1166 = vpop.f32.mrb[0].mxu0
        %v1167 = vadd.f32 0.0, %v1166
        %v1168 = vpop.f32.mrb[0].mxu0
        %v1169 = vpop.f32.mrb[0].mxu0
        %v1170 = vadd.f32 0.0, %v1169
        %v1171 = vpop.f32.mrb[0].mxu0
        %1172 = vdwg.mxu0
        %v1173 = vadd.f32 %v938, %v1111
        %v1174 = vadd.f32 %v941, %v1114
        %v1175 = vadd.f32 %v946, %v1119
        %v1176 = vadd.f32 %v949, %v1122
        %v1177 = vadd.f32 %v954, %v1127
        %v1178 = vadd.f32 %v957, %v1130
        %v1179 = vadd.f32 %v962, %v1135
        %v1180 = vadd.f32 %v965, %v1138
        %v1181 = vadd.f32 %v970, %v1143
        %v1182 = vadd.f32 %v973, %v1146
        %v1183 = vadd.f32 %v978, %v1151
        %v1184 = vadd.f32 %v981, %v1154
        %v1185 = vadd.f32 %v986, %v1159
        %v1186 = vadd.f32 %v989, %v1162
        %v1187 = vadd.f32 %v994, %v1167
        %v1188 = vadd.f32 %v997, %v1170
        %v1189 = vld [vmem:[%s3] sm:$0x1]
        %v1191 = vlaneseq
        %v1192 = vshrl.u32 %v1191, 7
        %v1193 = vsub.s32 0, %v1192
        %v1194 = vrot.slane %v1189, %v1193
        %v1196 = vadd.f32 %v1173, %v1194
        %v1197 = vadd.f32 %v1174, %v1194
        %v1198 = vadd.f32 %v1175, %v1194
        %v1199 = vadd.f32 %v1176, %v1194
        %v1200 = vadd.f32 %v1177, %v1194
        %v1201 = vadd.f32 %v1178, %v1194
        %v1202 = vadd.f32 %v1179, %v1194
        %v1203 = vadd.f32 %v1180, %v1194
        %v1204 = vadd.f32 %v1181, %v1194
        %v1205 = vadd.f32 %v1182, %v1194
        %v1206 = vadd.f32 %v1183, %v1194
        %v1207 = vadd.f32 %v1184, %v1194
        %v1208 = vadd.f32 %v1185, %v1194
        %v1209 = vadd.f32 %v1186, %v1194
        %v1210 = vadd.f32 %v1187, %v1194
        %v1211 = vadd.f32 %v1188, %v1194
        %v1212 = vmax.f32 %v1196, 0.0
        %v1213 = vmax.f32 %v1197, 0.0
        %v1214 = vmax.f32 %v1198, 0.0
        %v1215 = vmax.f32 %v1199, 0.0
        %v1216 = vmax.f32 %v1200, 0.0
        %v1217 = vmax.f32 %v1201, 0.0
        %v1218 = vmax.f32 %v1202, 0.0
        %v1219 = vmax.f32 %v1203, 0.0
        %v1220 = vmax.f32 %v1204, 0.0
        %v1221 = vmax.f32 %v1205, 0.0
        %v1222 = vmax.f32 %v1206, 0.0
        %v1223 = vmax.f32 %v1207, 0.0
        %v1224 = vmax.f32 %v1208, 0.0
        %v1225 = vmax.f32 %v1209, 0.0
        %v1226 = vmax.f32 %v1210, 0.0
        %v1227 = vmax.f32 %v1211, 0.0
        %v1228 = vpack.c.bf16 %v1213, %v1212
        %v1229 = vpack.c.bf16 %v1215, %v1214
        %v1230 = vpack.c.bf16 %v1217, %v1216
        %v1231 = vpack.c.bf16 %v1219, %v1218
        %v1232 = vpack.c.bf16 %v1221, %v1220
        %v1233 = vpack.c.bf16 %v1223, %v1222
        %v1234 = vpack.c.bf16 %v1225, %v1224
        %v1235 = vpack.c.bf16 %v1227, %v1226
        %v1236 = vld [vmem:[%s4] sm:$0xf]
        %v1237 = vld [vmem:[%s4 + $0x4] sm:$0xf]
        %v1238 = vld [vmem:[%s5] sm:$0xff]
        %v1239 = vld [vmem:[%s5 + $0x8] sm:$0x7f]
        %1241 = vset.pattern.permute.xlu0 0
        %1242 = vperm.xlu0 %1241, %v1238
        %v1243 = vpop.permute.xlu0 %1242
        %1246 = vset.pattern.permute.xlu0 0
        %1247 = vperm.xlu0 %1246, %v1239
        %v1248 = vpop.permute.xlu0 %1247
        %v1252 = vunpack.c.l.b16 %v1236
        %v1253 = vunpack.c.l.b16 %v1237
        %v1254 = vpack.c.b16 %v1253, %v1252
        %v1256 = vsel %vm518, %v1254, 0
        %v1259 = vsel %vm518, %v1228, 0
        %v1262 = vsel %vm518, %v1229, 0
        %v1265 = vsel %vm518, %v1230, 0
        %v1268 = vsel %vm518, %v1231, 0
        %v1271 = vsel %vm518, %v1232, 0
        %v1274 = vsel %vm518, %v1233, 0
        %v1277 = vsel %vm518, %v1234, 0
        %v1280 = vsel %vm518, %v1235, 0
        %1282 = vmatprep.subr.bf16.mxu0 0
        %1283 = vmatpush1.bf16.xpose.msra.mxu0 %v1259
        %1284 = vmatprep.subr.bf16.mxu0 0
        %1285 = vmatpush1.bf16.xpose.msra.mxu0 %v1262
        %1286 = vmatprep.subr.bf16.mxu0 0
        %1287 = vmatpush1.bf16.xpose.msra.mxu0 %v1265
        %1288 = vmatprep.subr.bf16.mxu0 0
        %1289 = vmatpush1.bf16.xpose.msra.mxu0 %v1268
        %1290 = vmatprep.subr.bf16.mxu0 0
        %1291 = vmatpush1.bf16.xpose.msra.mxu0 %v1271
        %1292 = vmatprep.subr.bf16.mxu0 0
        %1293 = vmatpush1.bf16.xpose.msra.mxu0 %v1274
        %1294 = vmatprep.subr.bf16.mxu0 0
        %1295 = vmatpush1.bf16.xpose.msra.mxu0 %v1277
        %1296 = vmatprep.subr.bf16.mxu0 0
        %1297 = vmatpush1.bf16.xpose.msra.mxu0 %v1280
        %1298 = vmatprep.subr.bf16.mxu0 0
        %1299 = vmatpush1.bf16.xpose.msra.mxu0 0
        %1300 = vmatprep.subr.bf16.mxu0 0
        %1301 = vmatpush1.bf16.xpose.msra.mxu0 0
        %1302 = vmatprep.subr.bf16.mxu0 0
        %1303 = vmatpush1.bf16.xpose.msra.mxu0 0
        %1304 = vmatprep.subr.bf16.mxu0 0
        %1305 = vmatpush1.bf16.xpose.msra.mxu0 0
        %1306 = vmatprep.subr.bf16.mxu0 0
        %1307 = vmatpush1.bf16.xpose.msra.mxu0 0
        %1308 = vmatprep.subr.bf16.mxu0 0
        %1309 = vmatpush1.bf16.xpose.msra.mxu0 0
        %1310 = vmatprep.subr.bf16.mxu0 0
        %1311 = vmatpush1.bf16.xpose.msra.mxu0 0
        %1312 = vmatprep.subr.bf16.mxu0 0
        %1313 = vmatpush1.bf16.xpose.msra.mxu0 0
        %1314 = vmatprep.mubr.bf16.mxu0 0
        %1315 = vmatmul.mubr.bf16.gmra.mrb[0].mxu0 %v1256
        %v1316 = vpop.f32.mrb[0].mxu0
        %v1317 = vadd.f32 %v1243, %v1316
        %v1318 = vpop.f32.mrb[0].mxu0
        %v1319 = vpop.f32.mrb[0].mxu0
        %v1320 = vadd.f32 %v1248, %v1319
        %v1321 = vpop.f32.mrb[0].mxu0
        %1322 = vdwg.mxu0
        %1323 = vst [vmem:[%s404] sm:$0x7] %v1317
        %1324 = vst [vmem:[%s360 - $0x3] sm:$0xf8] %v1317
        %1325 = vst [vmem:[%s360 + $0x5] sm:$0x7f] %v1320
        %p1326 = scmp.lt.s32.totalorder %s23, 1
        %s1327 = scalar_select %p1326, %s23, 1
        %p1328 = scmp.lt.s32.totalorder %s24, 1
        %s1329 = scalar_select %p1328, %s24, 1
        %s1330 = smul.addr %s1327, 2
        %s1331 = sadd.s32 %s1329, %s1330
        %s1332 = smul.addr %s1331, 4
        %s1333 = scalar_lea.vmem %s6, %s1332
        %s1334 = sand.u32 %s213, 1
        %s1335 = sand.u32 %s213, 1
        %s1336 = smul.addr %s1335, 16
        %s1337 = scalar_lea.vmem [#allocation2], %s1336
        // Predicated region
        $region45: #{tpu_custom_call.1} parent=43 // pred_check
          %p1338 = pneg %p195
        $region46: #{tpu_custom_call.1} parent=43 // pred_check_branch
          %1340 = sbr.rel (%p1338) target = $region48
        $region47: #{tpu_custom_call.1} parent=43 // pred_region
          _
        $region48: #{tpu_custom_call.1} parent=43 // pred_fallthru
          _
        // Predicated region
        $region49: #{tpu_custom_call.1} parent=43 // pred_check
          %p1341 = pneg %p223
        $region50: #{tpu_custom_call.1} parent=43 // pred_check_branch
          %1343 = sbr.rel (%p1341) target = $region52
        $region51: #{tpu_custom_call.1} parent=43 // pred_region
          %s1344 = smul.addr %s23, 4
          %s1345 = sadd.s32 %s24, %s1344
          %s1346 = smul.addr %s1345, 8
          %s1347 = scalar_lea.vmem %s7, %s1346
          // Predicated region
          $region53: #{tpu_custom_call.1} parent=51 // pred_check
            _
          $region54: #{tpu_custom_call.1} parent=51 // pred_check_branch
            %1349 = sbr.rel (0) target = $region56
          $region55: #{tpu_custom_call.1} parent=51 // pred_region
            // Predicated region
            $region57: #{tpu_custom_call.1} parent=55 // pred_check
              _
            $region58: #{tpu_custom_call.1} parent=55 // pred_check_branch
              %1351 = sbr.rel (0) target = $region60
            $region59: #{tpu_custom_call.1} parent=55 // pred_region
              // Predicated region
              $region72: #{tpu_custom_call.1} parent=59 // pred_check
                _
              $region73: #{tpu_custom_call.1} parent=59 // pred_check_branch
                %1368 = sbr.rel (0) target = $region75
              $region74: #{tpu_custom_call.1} parent=59 // pred_region
                loop: start=0, step=1, limit=1
                $region76: #{tpu_custom_call.1} parent=74 // loop_pre_header
                  _
                $region77: #{tpu_custom_call.1} parent=74 // loop_header
                  %s1370 = sphi 0, %s1374
                  %p1371 = scmp.ge.s32.totalorder %s1370, 1
                  %s1375 = sphi %s1337, %s1337
                  %s1376 = sphi %s1347, %s1347
                $region78: #{tpu_custom_call.1} parent=74 // loop_header_branch
                  %1373 = sbr.rel (%p1371) target = $region82
                $region79: #{tpu_custom_call.1} parent=74 // loop_body
                  %v1377 = vld [vmem:[%s1375] sm:$0xff]
                  %1378 = vst [vmem:[%s1376] sm:$0xff] %v1377
                  %v1379 = vld [vmem:[%s1375 + $0x8] sm:$0xff]
                  %1380 = vst [vmem:[%s1376 + $0x10] sm:$0xff] %v1379
                $region80: #{tpu_custom_call.1} parent=74 // loop_footer
                  %s1374 = sadd.s32 1, %s1370
                $region81: #{tpu_custom_call.1} parent=74 // loop_footer_branch
                  %1369 = sbr.rel target = $region77
                $region82: #{tpu_custom_call.1} parent=74 // loop_exit
                  _
              $region75: #{tpu_custom_call.1} parent=59 // pred_fallthru
                _
              // Predicated region
              $region83: #{tpu_custom_call.1} parent=59 // pred_check
                _
              $region84: #{tpu_custom_call.1} parent=59 // pred_check_branch
                %1382 = sbr.rel target = $region86
              $region85: #{tpu_custom_call.1} parent=59 // pred_region
                _
              $region86: #{tpu_custom_call.1} parent=59 // pred_fallthru
                _
            $region60: #{tpu_custom_call.1} parent=55 // pred_fallthru
              _
            // Predicated region
            $region61: #{tpu_custom_call.1} parent=55 // pred_check
              _
            $region62: #{tpu_custom_call.1} parent=55 // pred_check_branch
              %1353 = sbr.rel target = $region64
            $region63: #{tpu_custom_call.1} parent=55 // pred_region
              loop: start=0, step=1, limit=1
              $region65: #{tpu_custom_call.1} parent=63 // loop_pre_header
                _
              $region66: #{tpu_custom_call.1} parent=63 // loop_header
                %s1356 = sphi 0, %s1360
                %p1357 = scmp.ge.s32.totalorder %s1356, 1
                %s1361 = sphi %s1337, %s1337
                %s1362 = sphi %s1347, %s1347
              $region67: #{tpu_custom_call.1} parent=63 // loop_header_branch
                %1359 = sbr.rel (%p1357) target = $region71
              $region68: #{tpu_custom_call.1} parent=63 // loop_body
                %v1363 = vld [vmem:[%s1361] sm:$0xff]
                %1364 = vst [vmem:[%s1362] sm:$0xff] %v1363
                %v1365 = vld [vmem:[%s1361 + $0x8] sm:$0xff]
                %1366 = vst [vmem:[%s1362 + $0x10] sm:$0xff] %v1365
              $region69: #{tpu_custom_call.1} parent=63 // loop_footer
                %s1360 = sadd.s32 1, %s1356
              $region70: #{tpu_custom_call.1} parent=63 // loop_footer_branch
                %1355 = sbr.rel target = $region66
              $region71: #{tpu_custom_call.1} parent=63 // loop_exit
                _
            $region64: #{tpu_custom_call.1} parent=55 // pred_fallthru
              _
          $region56: #{tpu_custom_call.1} parent=51 // pred_fallthru
            _
          %1383 = vnop
        $region52: #{tpu_custom_call.1} parent=43 // pred_fallthru
          _
      $region44: #{tpu_custom_call.1} parent=5 // pred_fallthru
        _
      %p1384 = scmp.le.s32.totalorder 2, %s14
      // Predicated region
      $region87: #{tpu_custom_call.1} parent=5 // pred_check
        %p1385 = pneg %p1384
      $region88: #{tpu_custom_call.1} parent=5 // pred_check_branch
        %1387 = sbr.rel (%p1385) target = $region90
      $region89: #{tpu_custom_call.1} parent=5 // pred_region
        %s1388 = ssub.s32 %s14, 2
        // Predicated region
        $region91: #{tpu_custom_call.1} parent=89 // pred_check
          %p1389 = pneg %p201
        $region92: #{tpu_custom_call.1} parent=89 // pred_check_branch
          %1391 = sbr.rel (%p1389) target = $region94
        $region93: #{tpu_custom_call.1} parent=89 // pred_region
          %p1392 = scmp.lt.s32.totalorder %s25, 1
          %s1393 = scalar_select %p1392, %s25, 1
          %p1394 = scmp.lt.s32.totalorder %s26, 1
          %s1395 = scalar_select %p1394, %s26, 1
          %s1396 = smul.addr %s1393, 2
          %s1397 = sadd.s32 %s1395, %s1396
          %s1398 = smul.addr %s1397, 4
          %s1399 = scalar_lea.vmem %s6, %s1398
        $region94: #{tpu_custom_call.1} parent=89 // pred_fallthru
          _
        // Predicated region
        $region95: #{tpu_custom_call.1} parent=89 // pred_check
          %p1400 = pneg %p229
        $region96: #{tpu_custom_call.1} parent=89 // pred_check_branch
          %1402 = sbr.rel (%p1400) target = $region98
        $region97: #{tpu_custom_call.1} parent=89 // pred_region
          %s1403 = sand.u32 %s214, 1
          %s1404 = sand.u32 %s214, 1
          %s1405 = smul.addr %s1404, 16
          %s1406 = scalar_lea.vmem [#allocation2], %s1405
        $region98: #{tpu_custom_call.1} parent=89 // pred_fallthru
          _
      $region90: #{tpu_custom_call.1} parent=5 // pred_fallthru
        _
    $region6: #{tpu_custom_call.1} parent=1 // loop_footer
      %s18 = sadd.s32 1, %s14
    $region7: #{tpu_custom_call.1} parent=1 // loop_footer_branch
      %13 = sbr.rel target = $region3
    $region8: #{tpu_custom_call.1} parent=1 // loop_exit
      _

</llo_original>
